<compile_context>
chip_gen: v5e
topology: v5e:2x2
jax: 0.10.0
libtpu: 0.0.40
codegen_flags: <defaults>
</compile_context>

<pallas_src>
import functools

import jax
import jax.numpy as jnp
from jax.experimental import pallas as pl
from jax.experimental.pallas import tpu as pltpu


# ---------------------------------------------------------------------------
# helpers
# ---------------------------------------------------------------------------
@functools.lru_cache(maxsize=None)
def _vmem_limit_bytes():
    """~3/4 of per-core VMEM (96 MiB on v5e/v6e, 48 MiB on v7x); safe fallback."""
    try:
        cap = pltpu.get_tpu_info().vmem_capacity_bytes
        return int(min(cap * 3 // 4, 96 * 1024 * 1024))
    except Exception:
        return 48 * 1024 * 1024


def _needs_single_buffer(const_args, vmem_limit_bytes):
    """Single-buffer resident (constant-index) weights when double-buffering
    them would eat more than half the VMEM budget (ViT-B class dims)."""
    const_bytes = sum(int(a.size) * a.dtype.itemsize for a in const_args)
    return 2 * const_bytes > vmem_limit_bytes // 2


def _const_spec(arr, single_buffer=False):
    """Whole-array block, same block for every grid step (1-D grid)."""
    nd = arr.ndim
    index_map = lambda i, _nd=nd: (0,) * _nd
    if single_buffer:
        try:
            return pl.BlockSpec(arr.shape, index_map, pipeline_mode=pl.Buffered(1))
        except (AttributeError, TypeError):
            pass  # older jax: fall back to default (double-buffered) spec
    return pl.BlockSpec(arr.shape, index_map)


def _row_tile(total_rows, vmem_limit_bytes):
    """Row-slab size for the flattened (B*N, E) MLP.  Largest power-of-two
    slab (multiple of 8 sublanes) that keeps >= 2 grid steps (dual-TC chips),
    capped by the VMEM budget since fp32 intermediates scale with it."""
    cap = 1024 if vmem_limit_bytes >= 80 * 1024 * 1024 else 512
    tile = 8
    while tile * 2 <= cap and total_rows >= tile * 4:
        tile *= 2
    if total_rows < 2 * tile:
        return max(total_rows, 1)
    return tile


# ---------------------------------------------------------------------------
# attention + first residual:   x1 = x + proj(MHSA(LN(x)))
# one grid step per batch element
# ---------------------------------------------------------------------------
def _attn_kernel(x_ref, g_ref, b_ref, wqkv_ref, bqkv_ref, wp_ref, bp_ref,
                 o_ref, ctx_ref, *, num_heads):
    eps = 1e-5
    x = x_ref[0].astype(jnp.float32)                       # (N, E) fp32
    N, E = x.shape
    hd = E // num_heads
    scale = float(hd) ** -0.5

    # LayerNorm (fp32 stats)
    mu = jnp.mean(x, axis=-1, keepdims=True)
    var = jnp.mean((x - mu) ** 2, axis=-1, keepdims=True)
    xn = (x - mu) * jax.lax.rsqrt(var + eps) * g_ref[...] + b_ref[...]
    xn_b = xn.astype(jnp.bfloat16)

    # fused, lane-dense QKV projection: (N,E) x (E,3E)
    qkv = jnp.dot(xn_b, wqkv_ref[...],
                  preferred_element_type=jnp.float32) + bqkv_ref[...]
    q = qkv[:, :E] * scale                                  # fold 1/sqrt(hd) into q
    k = qkv[:, E:2 * E]
    v = qkv[:, 2 * E:]

    # per-head score / softmax / context; context slices land in VMEM scratch
    # (bounded live ranges, no fp32 (N,E) accumulator adds).
    for h in range(num_heads):                              # statically unrolled
        sl = slice(h * hd, (h + 1) * hd)
        qh = q[:, sl].astype(jnp.bfloat16)
        kh = k[:, sl].astype(jnp.bfloat16)
        vh = v[:, sl].astype(jnp.bfloat16)
        s = jax.lax.dot_general(                            # q_h @ k_h.T  -> (N, N)
            qh, kh, dimension_numbers=(((1,), (1,)), ((), ())),
            preferred_element_type=jnp.float32)
        m = jnp.max(s, axis=-1, keepdims=True)
        e = jnp.exp(s - m)
        p = e * pl.reciprocal(jnp.sum(e, axis=-1, keepdims=True), approx=True)
        ctx_ref[:, sl] = jnp.dot(p.astype(jnp.bfloat16), vh,
                                 preferred_element_type=jnp.float32)

    # fused, lane-dense output projection: (N,E) x (E,E)
    attn = jnp.dot(ctx_ref[...].astype(jnp.bfloat16), wp_ref[...],
                   preferred_element_type=jnp.float32) + bp_ref[...]
    o_ref[0] = (x + attn).astype(o_ref.dtype)


# ---------------------------------------------------------------------------
# MLP + second residual:   out = x1 + fc3(relu(fc2(relu(fc1(LN(x1))))))
# operates on a (TILE_M, E) slab of the flattened (B*N, E) activations
# ---------------------------------------------------------------------------
def _mlp_kernel(x_ref, g_ref, b_ref, w1_ref, b1_ref, w2_ref, b2_ref,
                w3_ref, b3_ref, o_ref):
    eps = 1e-5
    x = x_ref[...].astype(jnp.float32)                      # (TM, E) fp32
    mu = jnp.mean(x, axis=-1, keepdims=True)
    var = jnp.mean((x - mu) ** 2, axis=-1, keepdims=True)
    xn = ((x - mu) * jax.lax.rsqrt(var + eps) * g_ref[...] + b_ref[...]
          ).astype(jnp.bfloat16)

    h1 = jnp.maximum(
        jnp.dot(xn, w1_ref[...], preferred_element_type=jnp.float32)
        + b1_ref[...], 0.0)
    h2 = jnp.maximum(
        jnp.dot(h1.astype(jnp.bfloat16), w2_ref[...],
                preferred_element_type=jnp.float32) + b2_ref[...], 0.0)
    h3 = jnp.dot(h2.astype(jnp.bfloat16), w3_ref[...],
                 preferred_element_type=jnp.float32) + b3_ref[...]

    o_ref[...] = (x + h3).astype(o_ref.dtype)


# ---------------------------------------------------------------------------
# wrapper
# ---------------------------------------------------------------------------
def block_forward(x, params, num_heads):
    B, N, E = x.shape
    f32, bf16 = jnp.float32, jnp.bfloat16
    vmem_limit = _vmem_limit_bytes()

    ln_g = params['ln_g'].astype(f32)                       # (1, E)
    ln_b = params['ln_b'].astype(f32)

    # attention weights consumed directly in their stored (in, out) layout
    wqkv = params['wqkv'].astype(bf16)                      # (E, 3E)
    bqkv = params['bqkv'].astype(f32)                       # (1, 3E)
    wproj = params['wproj'].astype(bf16)                    # (E, E)
    bproj = params['bproj'].astype(f32)                     # (1, E)

    attn_consts = [ln_g, ln_b, wqkv, bqkv, wproj, bproj]
    attn_single = _needs_single_buffer(attn_consts, vmem_limit)
    attn_specs = [pl.BlockSpec((1, N, E), lambda b: (b, 0, 0))]
    attn_specs += [_const_spec(a, attn_single) for a in attn_consts]

    x1 = pl.pallas_call(
        functools.partial(_attn_kernel, num_heads=num_heads),
        out_shape=jax.ShapeDtypeStruct((B, N, E), bf16),    # bf16 residual: half the round-trip bytes
        grid=(B,),
        in_specs=attn_specs,
        out_specs=pl.BlockSpec((1, N, E), lambda b: (b, 0, 0)),
        scratch_shapes=[pltpu.VMEM((N, E), jnp.float32)],   # per-head context slab
        compiler_params=pltpu.CompilerParams(
            dimension_semantics=("parallel",),
            vmem_limit_bytes=vmem_limit),
    )(x, *attn_consts)

    # --- MLP branch: collapse (B, N) into one row axis and tile it ----------
    BN = B * N
    tm = _row_tile(BN, vmem_limit)
    pad = (-BN) % tm
    x1_flat = x1.reshape(BN, E)
    if pad:
        x1_flat = jnp.pad(x1_flat, ((0, pad), (0, 0)))
    rows = BN + pad

    w1 = params['w1'].astype(bf16); b1 = params['b1'].astype(f32)
    w2 = params['w2'].astype(bf16); b2 = params['b2'].astype(f32)
    w3 = params['w3'].astype(bf16); b3 = params['b3'].astype(f32)
    mlp_consts = [ln_g, ln_b, w1, b1, w2, b2, w3, b3]
    mlp_single = _needs_single_buffer(mlp_consts, vmem_limit)
    mlp_specs = [pl.BlockSpec((tm, E), lambda i: (i, 0))]
    mlp_specs += [_const_spec(a, mlp_single) for a in mlp_consts]

    out = pl.pallas_call(
        _mlp_kernel,
        out_shape=jax.ShapeDtypeStruct((rows, E), x.dtype),
        grid=(rows // tm,),
        in_specs=mlp_specs,
        out_specs=pl.BlockSpec((tm, E), lambda i: (i, 0)),
        compiler_params=pltpu.CompilerParams(
            dimension_semantics=("parallel",),
            vmem_limit_bytes=vmem_limit),
    )(x1_flat, *mlp_consts)

    if pad:
        out = out[:BN]
    return out.reshape(B, N, E)


# ---------------------------------------------------------------------------
# pure-JAX reference (fp32) for correctness checking
# ---------------------------------------------------------------------------
def block_reference(x, params, num_heads):
    eps = 1e-5
    B, N, E = x.shape
    hd = E // num_heads
    f = lambda a: a.astype(jnp.float32)
    g, b = f(params['ln_g'])[0], f(params['ln_b'])[0]

    def ln(t):
        mu = jnp.mean(t, axis=-1, keepdims=True)
        var = jnp.mean((t - mu) ** 2, axis=-1, keepdims=True)
        return (t - mu) / jnp.sqrt(var + eps) * g + b

    xn = ln(x)
    qkv = xn @ f(params['wqkv']) + f(params['bqkv'])[0]
    qkv = qkv.reshape(B, N, 3, num_heads, hd).transpose(2, 0, 3, 1, 4)
    q, k, v = qkv[0], qkv[1], qkv[2]                        # (B, H, N, hd)
    scores = (q @ jnp.swapaxes(k, -2, -1)) * (hd ** -0.5)
    probs = jax.nn.softmax(scores, axis=-1)
    out = (probs @ v).transpose(0, 2, 1, 3).reshape(B, N, E)
    attn = out @ f(params['wproj']) + f(params['bproj'])[0]
    x1 = x + attn

    xn2 = ln(x1)
    h1 = jax.nn.relu(xn2 @ f(params['w1']) + f(params['b1'])[0])
    h2 = jax.nn.relu(h1 @ f(params['w2']) + f(params['b2'])[0])
    h3 = h2 @ f(params['w3']) + f(params['b3'])[0]
    return x1 + h3


def init_params(key, embed_dim, hidden_dim):
    ks = jax.random.split(key, 8)
    s = 0.02
    bf16 = jnp.bfloat16
    return {
        'ln_g': jnp.ones((1, embed_dim), jnp.float32),
        'ln_b': jnp.zeros((1, embed_dim), jnp.float32),
        # matmul weights stored in bf16, (in_features, out_features) layout
        'wqkv': (s * jax.random.normal(ks[0], (embed_dim, 3 * embed_dim), jnp.float32)).astype(bf16),
        'bqkv': s * jax.random.normal(ks[1], (1, 3 * embed_dim), jnp.float32),
        'wproj': (s * jax.random.normal(ks[2], (embed_dim, embed_dim), jnp.float32)).astype(bf16),
        'bproj': s * jax.random.normal(ks[3], (1, embed_dim), jnp.float32),
        'w1': (s * jax.random.normal(ks[4], (embed_dim, hidden_dim), jnp.float32)).astype(bf16),
        'b1': jnp.zeros((1, hidden_dim), jnp.float32),
        'w2': (s * jax.random.normal(ks[5], (hidden_dim, hidden_dim), jnp.float32)).astype(bf16),
        'b2': jnp.zeros((1, hidden_dim), jnp.float32),
        'w3': (s * jax.random.normal(ks[6], (hidden_dim, embed_dim), jnp.float32)).astype(bf16),
        'b3': jnp.zeros((1, embed_dim), jnp.float32),
    }


if __name__ == "__main__":
    # small shapes consistent with the module: batch=2, seq=8, embed=32, hidden=64, heads=4
    B, N, E, HID, num_heads = 2, 8, 32, 64, 4

    key = jax.random.PRNGKey(0)
    kx, kp = jax.random.split(key)
    x = jax.random.normal(kx, (B, N, E), jnp.float32)
    params = init_params(kp, E, HID)

    fwd = jax.jit(functools.partial(block_forward, num_heads=num_heads))
    out = jax.block_until_ready(fwd(x, params))

    ref = block_reference(x, params, num_heads)
    assert out.shape == (B, N, E)
    assert jnp.allclose(out, ref, rtol=2e-2, atol=2e-2), "mismatch vs reference"

    # TODO(synk): dropout layers (attn/proj/mlp) are treated as identity (inference mode).
    print("KERNEL_OK")
</pallas_src>

<mosaic_0001>
module attributes {stable_mosaic.version = 11 : i64} {
  func.func @_mlp_kernel(%arg0: i32, %arg1: memref<8x32xbf16, #tpu.memory_space<vmem>>, %arg2: memref<1x32xf32, #tpu.memory_space<vmem>>, %arg3: memref<1x32xf32, #tpu.memory_space<vmem>>, %arg4: memref<32x64xbf16, #tpu.memory_space<vmem>>, %arg5: memref<1x64xf32, #tpu.memory_space<vmem>>, %arg6: memref<64x64xbf16, #tpu.memory_space<vmem>>, %arg7: memref<1x64xf32, #tpu.memory_space<vmem>>, %arg8: memref<64x32xbf16, #tpu.memory_space<vmem>>, %arg9: memref<1x32xf32, #tpu.memory_space<vmem>>, %arg10: memref<8x32xf32, #tpu.memory_space<vmem>>) attributes {dimension_semantics = [#tpu.dimension_semantics<parallel>], iteration_bounds = array<i64: 2>, scalar_prefetch = 0 : i64, scratch_operands = 0 : i64, tpu.core_type = #tpu.core_type<tc>, window_params = [{transform_indices = @transform_0, window_bounds = array<i64: 8, 32>}, {pipeline_mode = #tpu.pipeline_mode<synchronous>, transform_indices = @transform_1, window_bounds = array<i64: 1, 32>}, {pipeline_mode = #tpu.pipeline_mode<synchronous>, transform_indices = @transform_2, window_bounds = array<i64: 1, 32>}, {pipeline_mode = #tpu.pipeline_mode<synchronous>, transform_indices = @transform_3, window_bounds = array<i64: 32, 64>}, {pipeline_mode = #tpu.pipeline_mode<synchronous>, transform_indices = @transform_4, window_bounds = array<i64: 1, 64>}, {pipeline_mode = #tpu.pipeline_mode<synchronous>, transform_indices = @transform_5, window_bounds = array<i64: 64, 64>}, {pipeline_mode = #tpu.pipeline_mode<synchronous>, transform_indices = @transform_6, window_bounds = array<i64: 1, 64>}, {pipeline_mode = #tpu.pipeline_mode<synchronous>, transform_indices = @transform_7, window_bounds = array<i64: 64, 32>}, {pipeline_mode = #tpu.pipeline_mode<synchronous>, transform_indices = @transform_8, window_bounds = array<i64: 1, 32>}, {transform_indices = @transform_9, window_bounds = array<i64: 8, 32>}]} {
    %c0 = arith.constant 0 : index
    %c0_0 = arith.constant 0 : index
    %0 = vector.load %arg1[%c0, %c0_0] : memref<8x32xbf16, #tpu.memory_space<vmem>>, vector<8x32xbf16>
    %1 = arith.extf %0 : vector<8x32xbf16> to vector<8x32xf32>
    %cst = arith.constant dense<0.000000e+00> : vector<8xf32>
    %2 = vector.multi_reduction <add>, %1, %cst [1] : vector<8x32xf32> to vector<8xf32>
    %3 = vector.shape_cast %2 : vector<8xf32> to vector<8x1xf32>
    %cst_1 = arith.constant 3.200000e+01 : f32
    %4 = vector.broadcast %cst_1 : f32 to vector<8x1xf32>
    %5 = arith.divf %3, %4 : vector<8x1xf32>
    %6 = vector.broadcast %5 : vector<8x1xf32> to vector<8x32xf32>
    %7 = arith.subf %1, %6 : vector<8x32xf32>
    %8 = arith.mulf %7, %7 : vector<8x32xf32>
    %cst_2 = arith.constant dense<0.000000e+00> : vector<8xf32>
    %9 = vector.multi_reduction <add>, %8, %cst_2 [1] : vector<8x32xf32> to vector<8xf32>
    %10 = vector.shape_cast %9 : vector<8xf32> to vector<8x1xf32>
    %cst_3 = arith.constant 3.200000e+01 : f32
    %11 = vector.broadcast %cst_3 : f32 to vector<8x1xf32>
    %12 = arith.divf %10, %11 : vector<8x1xf32>
    %13 = vector.broadcast %5 : vector<8x1xf32> to vector<8x32xf32>
    %14 = arith.subf %1, %13 : vector<8x32xf32>
    %cst_4 = arith.constant 9.99999974E-6 : f32
    %15 = vector.broadcast %cst_4 : f32 to vector<8x1xf32>
    %16 = arith.addf %12, %15 : vector<8x1xf32>
    %17 = math.rsqrt %16 : vector<8x1xf32>
    %18 = vector.broadcast %17 : vector<8x1xf32> to vector<8x32xf32>
    %19 = arith.mulf %14, %18 : vector<8x32xf32>
    %c0_5 = arith.constant 0 : index
    %c0_6 = arith.constant 0 : index
    %20 = vector.load %arg2[%c0_5, %c0_6] : memref<1x32xf32, #tpu.memory_space<vmem>>, vector<1x32xf32>
    %21 = vector.broadcast %20 : vector<1x32xf32> to vector<8x32xf32>
    %22 = arith.mulf %19, %21 : vector<8x32xf32>
    %c0_7 = arith.constant 0 : index
    %c0_8 = arith.constant 0 : index
    %23 = vector.load %arg3[%c0_7, %c0_8] : memref<1x32xf32, #tpu.memory_space<vmem>>, vector<1x32xf32>
    %24 = vector.broadcast %23 : vector<1x32xf32> to vector<8x32xf32>
    %25 = arith.addf %22, %24 : vector<8x32xf32>
    %26 = arith.truncf %25 : vector<8x32xf32> to vector<8x32xbf16>
    %c0_9 = arith.constant 0 : index
    %c0_10 = arith.constant 0 : index
    %27 = vector.load %arg4[%c0_9, %c0_10] : memref<32x64xbf16, #tpu.memory_space<vmem>>, vector<32x64xbf16>
    %cst_11 = arith.constant dense<0.000000e+00> : vector<8x64xf32>
    %28 = tpu.matmul %26, %27, %cst_11 {dimension_numbers = #tpu.dot_dimension_numbers<[1], [0], [0], [1], [0, 0, 1, 1], [], []>} : vector<8x32xbf16>, vector<32x64xbf16>, vector<8x64xf32> -> vector<8x64xf32>
    %c0_12 = arith.constant 0 : index
    %c0_13 = arith.constant 0 : index
    %29 = vector.load %arg5[%c0_12, %c0_13] : memref<1x64xf32, #tpu.memory_space<vmem>>, vector<1x64xf32>
    %30 = vector.broadcast %29 : vector<1x64xf32> to vector<8x64xf32>
    %31 = arith.addf %28, %30 : vector<8x64xf32>
    %cst_14 = arith.constant 0.000000e+00 : f32
    %32 = vector.broadcast %cst_14 : f32 to vector<8x64xf32>
    %33 = arith.maximumf %31, %32 : vector<8x64xf32>
    %34 = arith.truncf %33 : vector<8x64xf32> to vector<8x64xbf16>
    %c0_15 = arith.constant 0 : index
    %c0_16 = arith.constant 0 : index
    %35 = vector.load %arg6[%c0_15, %c0_16] : memref<64x64xbf16, #tpu.memory_space<vmem>>, vector<64x64xbf16>
    %cst_17 = arith.constant dense<0.000000e+00> : vector<8x64xf32>
    %36 = tpu.matmul %34, %35, %cst_17 {dimension_numbers = #tpu.dot_dimension_numbers<[1], [0], [0], [1], [0, 0, 1, 1], [], []>} : vector<8x64xbf16>, vector<64x64xbf16>, vector<8x64xf32> -> vector<8x64xf32>
    %c0_18 = arith.constant 0 : index
    %c0_19 = arith.constant 0 : index
    %37 = vector.load %arg7[%c0_18, %c0_19] : memref<1x64xf32, #tpu.memory_space<vmem>>, vector<1x64xf32>
    %38 = vector.broadcast %37 : vector<1x64xf32> to vector<8x64xf32>
    %39 = arith.addf %36, %38 : vector<8x64xf32>
    %cst_20 = arith.constant 0.000000e+00 : f32
    %40 = vector.broadcast %cst_20 : f32 to vector<8x64xf32>
    %41 = arith.maximumf %39, %40 : vector<8x64xf32>
    %42 = arith.truncf %41 : vector<8x64xf32> to vector<8x64xbf16>
    %c0_21 = arith.constant 0 : index
    %c0_22 = arith.constant 0 : index
    %43 = vector.load %arg8[%c0_21, %c0_22] : memref<64x32xbf16, #tpu.memory_space<vmem>>, vector<64x32xbf16>
    %cst_23 = arith.constant dense<0.000000e+00> : vector<8x32xf32>
    %44 = tpu.matmul %42, %43, %cst_23 {dimension_numbers = #tpu.dot_dimension_numbers<[1], [0], [0], [1], [0, 0, 1, 1], [], []>} : vector<8x64xbf16>, vector<64x32xbf16>, vector<8x32xf32> -> vector<8x32xf32>
    %c0_24 = arith.constant 0 : index
    %c0_25 = arith.constant 0 : index
    %45 = vector.load %arg9[%c0_24, %c0_25] : memref<1x32xf32, #tpu.memory_space<vmem>>, vector<1x32xf32>
    %46 = vector.broadcast %45 : vector<1x32xf32> to vector<8x32xf32>
    %47 = arith.addf %44, %46 : vector<8x32xf32>
    %48 = arith.addf %1, %47 : vector<8x32xf32>
    %c0_26 = arith.constant 0 : index
    %c0_27 = arith.constant 0 : index
    %49 = vector.load %arg10[%c0_26, %c0_27] : memref<8x32xf32, #tpu.memory_space<vmem>>, vector<8x32xf32>
    tpu.vector_store %arg10[%c0_26, %c0_27], %48 {strides = array<i32>} : memref<8x32xf32, #tpu.memory_space<vmem>>, vector<8x32xf32>,
    return
  }
  func.func @transform_0(%arg0: i32) -> (i32, i32) {
    %c0_i32 = arith.constant 0 : i32
    %c0_i32_0 = arith.constant 0 : i32
    return %arg0, %c0_i32 : i32, i32
  }
  func.func @transform_1(%arg0: i32) -> (i32, i32) {
    %c0_i32 = arith.constant 0 : i32
    %c0_i32_0 = arith.constant 0 : i32
    %c0_i32_1 = arith.constant 0 : i32
    return %c0_i32, %c0_i32_0 : i32, i32
  }
  func.func @transform_2(%arg0: i32) -> (i32, i32) {
    %c0_i32 = arith.constant 0 : i32
    %c0_i32_0 = arith.constant 0 : i32
    %c0_i32_1 = arith.constant 0 : i32
    return %c0_i32, %c0_i32_0 : i32, i32
  }
  func.func @transform_3(%arg0: i32) -> (i32, i32) {
    %c0_i32 = arith.constant 0 : i32
    %c0_i32_0 = arith.constant 0 : i32
    %c0_i32_1 = arith.constant 0 : i32
    return %c0_i32, %c0_i32_0 : i32, i32
  }
  func.func @transform_4(%arg0: i32) -> (i32, i32) {
    %c0_i32 = arith.constant 0 : i32
    %c0_i32_0 = arith.constant 0 : i32
    %c0_i32_1 = arith.constant 0 : i32
    return %c0_i32, %c0_i32_0 : i32, i32
  }
  func.func @transform_5(%arg0: i32) -> (i32, i32) {
    %c0_i32 = arith.constant 0 : i32
    %c0_i32_0 = arith.constant 0 : i32
    %c0_i32_1 = arith.constant 0 : i32
    return %c0_i32, %c0_i32_0 : i32, i32
  }
  func.func @transform_6(%arg0: i32) -> (i32, i32) {
    %c0_i32 = arith.constant 0 : i32
    %c0_i32_0 = arith.constant 0 : i32
    %c0_i32_1 = arith.constant 0 : i32
    return %c0_i32, %c0_i32_0 : i32, i32
  }
  func.func @transform_7(%arg0: i32) -> (i32, i32) {
    %c0_i32 = arith.constant 0 : i32
    %c0_i32_0 = arith.constant 0 : i32
    %c0_i32_1 = arith.constant 0 : i32
    return %c0_i32, %c0_i32_0 : i32, i32
  }
  func.func @transform_8(%arg0: i32) -> (i32, i32) {
    %c0_i32 = arith.constant 0 : i32
    %c0_i32_0 = arith.constant 0 : i32
    %c0_i32_1 = arith.constant 0 : i32
    return %c0_i32, %c0_i32_0 : i32, i32
  }
  func.func @transform_9(%arg0: i32) -> (i32, i32) {
    %c0_i32 = arith.constant 0 : i32
    %c0_i32_0 = arith.constant 0 : i32
    return %arg0, %c0_i32 : i32, i32
  }
}

module attributes {stable_mosaic.version = 11 : i64} {
  func.func @_attn_kernel(%arg0: i32, %arg1: memref<1x8x32xf32, #tpu.memory_space<vmem>>, %arg2: memref<1x32xf32, #tpu.memory_space<vmem>>, %arg3: memref<1x32xf32, #tpu.memory_space<vmem>>, %arg4: memref<32x96xbf16, #tpu.memory_space<vmem>>, %arg5: memref<1x96xf32, #tpu.memory_space<vmem>>, %arg6: memref<32x32xbf16, #tpu.memory_space<vmem>>, %arg7: memref<1x32xf32, #tpu.memory_space<vmem>>, %arg8: memref<1x8x32xbf16, #tpu.memory_space<vmem>>, %arg9: memref<8x32xf32, #tpu.memory_space<vmem>>) attributes {dimension_semantics = [#tpu.dimension_semantics<parallel>], iteration_bounds = array<i64: 2>, scalar_prefetch = 0 : i64, scratch_operands = 1 : i64, tpu.core_type = #tpu.core_type<tc>, window_params = [{transform_indices = @transform_0, window_bounds = array<i64: 1, 8, 32>}, {pipeline_mode = #tpu.pipeline_mode<synchronous>, transform_indices = @transform_1, window_bounds = array<i64: 1, 32>}, {pipeline_mode = #tpu.pipeline_mode<synchronous>, transform_indices = @transform_2, window_bounds = array<i64: 1, 32>}, {pipeline_mode = #tpu.pipeline_mode<synchronous>, transform_indices = @transform_3, window_bounds = array<i64: 32, 96>}, {pipeline_mode = #tpu.pipeline_mode<synchronous>, transform_indices = @transform_4, window_bounds = array<i64: 1, 96>}, {pipeline_mode = #tpu.pipeline_mode<synchronous>, transform_indices = @transform_5, window_bounds = array<i64: 32, 32>}, {pipeline_mode = #tpu.pipeline_mode<synchronous>, transform_indices = @transform_6, window_bounds = array<i64: 1, 32>}, {transform_indices = @transform_7, window_bounds = array<i64: 1, 8, 32>}]} {
    %c0 = arith.constant 0 : index
    %c0_0 = arith.constant 0 : index
    %c0_1 = arith.constant 0 : index
    %0 = vector.load %arg1[%c0, %c0_0, %c0_1] : memref<1x8x32xf32, #tpu.memory_space<vmem>>, vector<1x8x32xf32>
    %1 = vector.shape_cast %0 : vector<1x8x32xf32> to vector<8x32xf32>
    %cst = arith.constant dense<0.000000e+00> : vector<8xf32>
    %2 = vector.multi_reduction <add>, %1, %cst [1] : vector<8x32xf32> to vector<8xf32>
    %3 = vector.shape_cast %2 : vector<8xf32> to vector<8x1xf32>
    %cst_2 = arith.constant 3.200000e+01 : f32
    %4 = vector.broadcast %cst_2 : f32 to vector<8x1xf32>
    %5 = arith.divf %3, %4 : vector<8x1xf32>
    %6 = vector.broadcast %5 : vector<8x1xf32> to vector<8x32xf32>
    %7 = arith.subf %1, %6 : vector<8x32xf32>
    %8 = arith.mulf %7, %7 : vector<8x32xf32>
    %cst_3 = arith.constant dense<0.000000e+00> : vector<8xf32>
    %9 = vector.multi_reduction <add>, %8, %cst_3 [1] : vector<8x32xf32> to vector<8xf32>
    %10 = vector.shape_cast %9 : vector<8xf32> to vector<8x1xf32>
    %cst_4 = arith.constant 3.200000e+01 : f32
    %11 = vector.broadcast %cst_4 : f32 to vector<8x1xf32>
    %12 = arith.divf %10, %11 : vector<8x1xf32>
    %13 = vector.broadcast %5 : vector<8x1xf32> to vector<8x32xf32>
    %14 = arith.subf %1, %13 : vector<8x32xf32>
    %cst_5 = arith.constant 9.99999974E-6 : f32
    %15 = vector.broadcast %cst_5 : f32 to vector<8x1xf32>
    %16 = arith.addf %12, %15 : vector<8x1xf32>
    %17 = math.rsqrt %16 : vector<8x1xf32>
    %18 = vector.broadcast %17 : vector<8x1xf32> to vector<8x32xf32>
    %19 = arith.mulf %14, %18 : vector<8x32xf32>
    %c0_6 = arith.constant 0 : index
    %c0_7 = arith.constant 0 : index
    %20 = vector.load %arg2[%c0_6, %c0_7] : memref<1x32xf32, #tpu.memory_space<vmem>>, vector<1x32xf32>
    %21 = vector.broadcast %20 : vector<1x32xf32> to vector<8x32xf32>
    %22 = arith.mulf %19, %21 : vector<8x32xf32>
    %c0_8 = arith.constant 0 : index
    %c0_9 = arith.constant 0 : index
    %23 = vector.load %arg3[%c0_8, %c0_9] : memref<1x32xf32, #tpu.memory_space<vmem>>, vector<1x32xf32>
    %24 = vector.broadcast %23 : vector<1x32xf32> to vector<8x32xf32>
    %25 = arith.addf %22, %24 : vector<8x32xf32>
    %26 = arith.truncf %25 : vector<8x32xf32> to vector<8x32xbf16>
    %c0_10 = arith.constant 0 : index
    %c0_11 = arith.constant 0 : index
    %27 = vector.load %arg4[%c0_10, %c0_11] : memref<32x96xbf16, #tpu.memory_space<vmem>>, vector<32x96xbf16>
    %cst_12 = arith.constant dense<0.000000e+00> : vector<8x96xf32>
    %28 = tpu.matmul %26, %27, %cst_12 {dimension_numbers = #tpu.dot_dimension_numbers<[1], [0], [0], [1], [0, 0, 1, 1], [], []>} : vector<8x32xbf16>, vector<32x96xbf16>, vector<8x96xf32> -> vector<8x96xf32>
    %c0_13 = arith.constant 0 : index
    %c0_14 = arith.constant 0 : index
    %29 = vector.load %arg5[%c0_13, %c0_14] : memref<1x96xf32, #tpu.memory_space<vmem>>, vector<1x96xf32>
    %30 = vector.broadcast %29 : vector<1x96xf32> to vector<8x96xf32>
    %31 = arith.addf %28, %30 : vector<8x96xf32>
    %32 = vector.extract_strided_slice %31 {offsets = [0, 0], sizes = [8, 32], strides = [1, 1]} : vector<8x96xf32> to vector<8x32xf32>
    %cst_15 = arith.constant 0.353553385 : f32
    %33 = vector.broadcast %cst_15 : f32 to vector<8x32xf32>
    %34 = arith.mulf %32, %33 : vector<8x32xf32>
    %35 = vector.extract_strided_slice %31 {offsets = [0, 32], sizes = [8, 32], strides = [1, 1]} : vector<8x96xf32> to vector<8x32xf32>
    %36 = vector.extract_strided_slice %31 {offsets = [0, 64], sizes = [8, 32], strides = [1, 1]} : vector<8x96xf32> to vector<8x32xf32>
    %37 = vector.extract_strided_slice %34 {offsets = [0, 0], sizes = [8, 8], strides = [1, 1]} : vector<8x32xf32> to vector<8x8xf32>
    %38 = arith.truncf %37 : vector<8x8xf32> to vector<8x8xbf16>
    %39 = vector.extract_strided_slice %35 {offsets = [0, 0], sizes = [8, 8], strides = [1, 1]} : vector<8x32xf32> to vector<8x8xf32>
    %40 = arith.truncf %39 : vector<8x8xf32> to vector<8x8xbf16>
    %41 = vector.extract_strided_slice %36 {offsets = [0, 0], sizes = [8, 8], strides = [1, 1]} : vector<8x32xf32> to vector<8x8xf32>
    %42 = arith.truncf %41 : vector<8x8xf32> to vector<8x8xbf16>
    %cst_16 = arith.constant dense<0.000000e+00> : vector<8x8xf32>
    %43 = tpu.matmul %38, %40, %cst_16 {dimension_numbers = #tpu.dot_dimension_numbers<[1], [1], [0], [0], [0, 0, 1, 0], [], []>} : vector<8x8xbf16>, vector<8x8xbf16>, vector<8x8xf32> -> vector<8x8xf32>
    %cst_17 = arith.constant dense<0xFF800000> : vector<8xf32>
    %44 = vector.multi_reduction <maximumf>, %43, %cst_17 [1] : vector<8x8xf32> to vector<8xf32>
    %45 = vector.shape_cast %44 : vector<8xf32> to vector<8x1xf32>
    %46 = vector.broadcast %45 : vector<8x1xf32> to vector<8x8xf32>
    %47 = arith.subf %43, %46 : vector<8x8xf32>
    %48 = math.exp %47 : vector<8x8xf32>
    %cst_18 = arith.constant dense<0.000000e+00> : vector<8xf32>
    %49 = vector.multi_reduction <add>, %48, %cst_18 [1] : vector<8x8xf32> to vector<8xf32>
    %50 = vector.shape_cast %49 : vector<8xf32> to vector<8x1xf32>
    %51 = tpu.reciprocal %50 {approx = true} : vector<8x1xf32> -> vector<8x1xf32>
    %52 = vector.broadcast %51 : vector<8x1xf32> to vector<8x8xf32>
    %53 = arith.mulf %48, %52 : vector<8x8xf32>
    %54 = arith.truncf %53 : vector<8x8xf32> to vector<8x8xbf16>
    %cst_19 = arith.constant dense<0.000000e+00> : vector<8x8xf32>
    %55 = tpu.matmul %54, %42, %cst_19 {dimension_numbers = #tpu.dot_dimension_numbers<[1], [0], [0], [1], [0, 0, 1, 1], [], []>} : vector<8x8xbf16>, vector<8x8xbf16>, vector<8x8xf32> -> vector<8x8xf32>
    %c0_20 = arith.constant 0 : index
    %c0_21 = arith.constant 0 : index
    %56 = vector.load %arg9[%c0_20, %c0_21] : memref<8x32xf32, #tpu.memory_space<vmem>>, vector<8x8xf32>
    tpu.vector_store %arg9[%c0_20, %c0_21], %55 {strides = array<i32>} : memref<8x32xf32, #tpu.memory_space<vmem>>, vector<8x8xf32>,
    %57 = vector.extract_strided_slice %34 {offsets = [0, 8], sizes = [8, 8], strides = [1, 1]} : vector<8x32xf32> to vector<8x8xf32>
    %58 = arith.truncf %57 : vector<8x8xf32> to vector<8x8xbf16>
    %59 = vector.extract_strided_slice %35 {offsets = [0, 8], sizes = [8, 8], strides = [1, 1]} : vector<8x32xf32> to vector<8x8xf32>
    %60 = arith.truncf %59 : vector<8x8xf32> to vector<8x8xbf16>
    %61 = vector.extract_strided_slice %36 {offsets = [0, 8], sizes = [8, 8], strides = [1, 1]} : vector<8x32xf32> to vector<8x8xf32>
    %62 = arith.truncf %61 : vector<8x8xf32> to vector<8x8xbf16>
    %cst_22 = arith.constant dense<0.000000e+00> : vector<8x8xf32>
    %63 = tpu.matmul %58, %60, %cst_22 {dimension_numbers = #tpu.dot_dimension_numbers<[1], [1], [0], [0], [0, 0, 1, 0], [], []>} : vector<8x8xbf16>, vector<8x8xbf16>, vector<8x8xf32> -> vector<8x8xf32>
    %cst_23 = arith.constant dense<0xFF800000> : vector<8xf32>
    %64 = vector.multi_reduction <maximumf>, %63, %cst_23 [1] : vector<8x8xf32> to vector<8xf32>
    %65 = vector.shape_cast %64 : vector<8xf32> to vector<8x1xf32>
    %66 = vector.broadcast %65 : vector<8x1xf32> to vector<8x8xf32>
    %67 = arith.subf %63, %66 : vector<8x8xf32>
    %68 = math.exp %67 : vector<8x8xf32>
    %cst_24 = arith.constant dense<0.000000e+00> : vector<8xf32>
    %69 = vector.multi_reduction <add>, %68, %cst_24 [1] : vector<8x8xf32> to vector<8xf32>
    %70 = vector.shape_cast %69 : vector<8xf32> to vector<8x1xf32>
    %71 = tpu.reciprocal %70 {approx = true} : vector<8x1xf32> -> vector<8x1xf32>
    %72 = vector.broadcast %71 : vector<8x1xf32> to vector<8x8xf32>
    %73 = arith.mulf %68, %72 : vector<8x8xf32>
    %74 = arith.truncf %73 : vector<8x8xf32> to vector<8x8xbf16>
    %cst_25 = arith.constant dense<0.000000e+00> : vector<8x8xf32>
    %75 = tpu.matmul %74, %62, %cst_25 {dimension_numbers = #tpu.dot_dimension_numbers<[1], [0], [0], [1], [0, 0, 1, 1], [], []>} : vector<8x8xbf16>, vector<8x8xbf16>, vector<8x8xf32> -> vector<8x8xf32>
    %c0_26 = arith.constant 0 : index
    %c8 = arith.constant 8 : index
    %76 = vector.load %arg9[%c0_26, %c8] : memref<8x32xf32, #tpu.memory_space<vmem>>, vector<8x8xf32>
    tpu.vector_store %arg9[%c0_26, %c8], %75 {strides = array<i32>} : memref<8x32xf32, #tpu.memory_space<vmem>>, vector<8x8xf32>,
    %77 = vector.extract_strided_slice %34 {offsets = [0, 16], sizes = [8, 8], strides = [1, 1]} : vector<8x32xf32> to vector<8x8xf32>
    %78 = arith.truncf %77 : vector<8x8xf32> to vector<8x8xbf16>
    %79 = vector.extract_strided_slice %35 {offsets = [0, 16], sizes = [8, 8], strides = [1, 1]} : vector<8x32xf32> to vector<8x8xf32>
    %80 = arith.truncf %79 : vector<8x8xf32> to vector<8x8xbf16>
    %81 = vector.extract_strided_slice %36 {offsets = [0, 16], sizes = [8, 8], strides = [1, 1]} : vector<8x32xf32> to vector<8x8xf32>
    %82 = arith.truncf %81 : vector<8x8xf32> to vector<8x8xbf16>
    %cst_27 = arith.constant dense<0.000000e+00> : vector<8x8xf32>
    %83 = tpu.matmul %78, %80, %cst_27 {dimension_numbers = #tpu.dot_dimension_numbers<[1], [1], [0], [0], [0, 0, 1, 0], [], []>} : vector<8x8xbf16>, vector<8x8xbf16>, vector<8x8xf32> -> vector<8x8xf32>
    %cst_28 = arith.constant dense<0xFF800000> : vector<8xf32>
    %84 = vector.multi_reduction <maximumf>, %83, %cst_28 [1] : vector<8x8xf32> to vector<8xf32>
    %85 = vector.shape_cast %84 : vector<8xf32> to vector<8x1xf32>
    %86 = vector.broadcast %85 : vector<8x1xf32> to vector<8x8xf32>
    %87 = arith.subf %83, %86 : vector<8x8xf32>
    %88 = math.exp %87 : vector<8x8xf32>
    %cst_29 = arith.constant dense<0.000000e+00> : vector<8xf32>
    %89 = vector.multi_reduction <add>, %88, %cst_29 [1] : vector<8x8xf32> to vector<8xf32>
    %90 = vector.shape_cast %89 : vector<8xf32> to vector<8x1xf32>
    %91 = tpu.reciprocal %90 {approx = true} : vector<8x1xf32> -> vector<8x1xf32>
    %92 = vector.broadcast %91 : vector<8x1xf32> to vector<8x8xf32>
    %93 = arith.mulf %88, %92 : vector<8x8xf32>
    %94 = arith.truncf %93 : vector<8x8xf32> to vector<8x8xbf16>
    %cst_30 = arith.constant dense<0.000000e+00> : vector<8x8xf32>
    %95 = tpu.matmul %94, %82, %cst_30 {dimension_numbers = #tpu.dot_dimension_numbers<[1], [0], [0], [1], [0, 0, 1, 1], [], []>} : vector<8x8xbf16>, vector<8x8xbf16>, vector<8x8xf32> -> vector<8x8xf32>
    %c0_31 = arith.constant 0 : index
    %c16 = arith.constant 16 : index
    %96 = vector.load %arg9[%c0_31, %c16] : memref<8x32xf32, #tpu.memory_space<vmem>>, vector<8x8xf32>
    tpu.vector_store %arg9[%c0_31, %c16], %95 {strides = array<i32>} : memref<8x32xf32, #tpu.memory_space<vmem>>, vector<8x8xf32>,
    %97 = vector.extract_strided_slice %34 {offsets = [0, 24], sizes = [8, 8], strides = [1, 1]} : vector<8x32xf32> to vector<8x8xf32>
    %98 = arith.truncf %97 : vector<8x8xf32> to vector<8x8xbf16>
    %99 = vector.extract_strided_slice %35 {offsets = [0, 24], sizes = [8, 8], strides = [1, 1]} : vector<8x32xf32> to vector<8x8xf32>
    %100 = arith.truncf %99 : vector<8x8xf32> to vector<8x8xbf16>
    %101 = vector.extract_strided_slice %36 {offsets = [0, 24], sizes = [8, 8], strides = [1, 1]} : vector<8x32xf32> to vector<8x8xf32>
    %102 = arith.truncf %101 : vector<8x8xf32> to vector<8x8xbf16>
    %cst_32 = arith.constant dense<0.000000e+00> : vector<8x8xf32>
    %103 = tpu.matmul %98, %100, %cst_32 {dimension_numbers = #tpu.dot_dimension_numbers<[1], [1], [0], [0], [0, 0, 1, 0], [], []>} : vector<8x8xbf16>, vector<8x8xbf16>, vector<8x8xf32> -> vector<8x8xf32>
    %cst_33 = arith.constant dense<0xFF800000> : vector<8xf32>
    %104 = vector.multi_reduction <maximumf>, %103, %cst_33 [1] : vector<8x8xf32> to vector<8xf32>
    %105 = vector.shape_cast %104 : vector<8xf32> to vector<8x1xf32>
    %106 = vector.broadcast %105 : vector<8x1xf32> to vector<8x8xf32>
    %107 = arith.subf %103, %106 : vector<8x8xf32>
    %108 = math.exp %107 : vector<8x8xf32>
    %cst_34 = arith.constant dense<0.000000e+00> : vector<8xf32>
    %109 = vector.multi_reduction <add>, %108, %cst_34 [1] : vector<8x8xf32> to vector<8xf32>
    %110 = vector.shape_cast %109 : vector<8xf32> to vector<8x1xf32>
    %111 = tpu.reciprocal %110 {approx = true} : vector<8x1xf32> -> vector<8x1xf32>
    %112 = vector.broadcast %111 : vector<8x1xf32> to vector<8x8xf32>
    %113 = arith.mulf %108, %112 : vector<8x8xf32>
    %114 = arith.truncf %113 : vector<8x8xf32> to vector<8x8xbf16>
    %cst_35 = arith.constant dense<0.000000e+00> : vector<8x8xf32>
    %115 = tpu.matmul %114, %102, %cst_35 {dimension_numbers = #tpu.dot_dimension_numbers<[1], [0], [0], [1], [0, 0, 1, 1], [], []>} : vector<8x8xbf16>, vector<8x8xbf16>, vector<8x8xf32> -> vector<8x8xf32>
    %c0_36 = arith.constant 0 : index
    %c24 = arith.constant 24 : index
    %116 = vector.load %arg9[%c0_36, %c24] : memref<8x32xf32, #tpu.memory_space<vmem>>, vector<8x8xf32>
    tpu.vector_store %arg9[%c0_36, %c24], %115 {strides = array<i32>} : memref<8x32xf32, #tpu.memory_space<vmem>>, vector<8x8xf32>,
    %c0_37 = arith.constant 0 : index
    %c0_38 = arith.constant 0 : index
    %117 = vector.load %arg9[%c0_37, %c0_38] : memref<8x32xf32, #tpu.memory_space<vmem>>, vector<8x32xf32>
    %118 = arith.truncf %117 : vector<8x32xf32> to vector<8x32xbf16>
    %c0_39 = arith.constant 0 : index
    %c0_40 = arith.constant 0 : index
    %119 = vector.load %arg6[%c0_39, %c0_40] : memref<32x32xbf16, #tpu.memory_space<vmem>>, vector<32x32xbf16>
    %cst_41 = arith.constant dense<0.000000e+00> : vector<8x32xf32>
    %120 = tpu.matmul %118, %119, %cst_41 {dimension_numbers = #tpu.dot_dimension_numbers<[1], [0], [0], [1], [0, 0, 1, 1], [], []>} : vector<8x32xbf16>, vector<32x32xbf16>, vector<8x32xf32> -> vector<8x32xf32>
    %c0_42 = arith.constant 0 : index
    %c0_43 = arith.constant 0 : index
    %121 = vector.load %arg7[%c0_42, %c0_43] : memref<1x32xf32, #tpu.memory_space<vmem>>, vector<1x32xf32>
    %122 = vector.broadcast %121 : vector<1x32xf32> to vector<8x32xf32>
    %123 = arith.addf %120, %122 : vector<8x32xf32>
    %124 = arith.addf %1, %123 : vector<8x32xf32>
    %125 = arith.truncf %124 : vector<8x32xf32> to vector<8x32xbf16>
    %c0_44 = arith.constant 0 : index
    %c0_45 = arith.constant 0 : index
    %c0_46 = arith.constant 0 : index
    %126 = vector.load %arg8[%c0_44, %c0_45, %c0_46] : memref<1x8x32xbf16, #tpu.memory_space<vmem>>, vector<1x8x32xbf16>
    %127 = vector.shape_cast %126 : vector<1x8x32xbf16> to vector<8x32xbf16>
    %128 = vector.shape_cast %125 : vector<8x32xbf16> to vector<1x8x32xbf16>
    tpu.vector_store %arg8[%c0_44, %c0_45, %c0_46], %128 {strides = array<i32>} : memref<1x8x32xbf16, #tpu.memory_space<vmem>>, vector<1x8x32xbf16>,
    return
  }
  func.func @transform_0(%arg0: i32) -> (i32, i32, i32) {
    %c0_i32 = arith.constant 0 : i32
    %c0_i32_0 = arith.constant 0 : i32
    %c0_i32_1 = arith.constant 0 : i32
    return %arg0, %c0_i32, %c0_i32_0 : i32, i32, i32
  }
  func.func @transform_1(%arg0: i32) -> (i32, i32) {
    %c0_i32 = arith.constant 0 : i32
    %c0_i32_0 = arith.constant 0 : i32
    %c0_i32_1 = arith.constant 0 : i32
    return %c0_i32, %c0_i32_0 : i32, i32
  }
  func.func @transform_2(%arg0: i32) -> (i32, i32) {
    %c0_i32 = arith.constant 0 : i32
    %c0_i32_0 = arith.constant 0 : i32
    %c0_i32_1 = arith.constant 0 : i32
    return %c0_i32, %c0_i32_0 : i32, i32
  }
  func.func @transform_3(%arg0: i32) -> (i32, i32) {
    %c0_i32 = arith.constant 0 : i32
    %c0_i32_0 = arith.constant 0 : i32
    %c0_i32_1 = arith.constant 0 : i32
    return %c0_i32, %c0_i32_0 : i32, i32
  }
  func.func @transform_4(%arg0: i32) -> (i32, i32) {
    %c0_i32 = arith.constant 0 : i32
    %c0_i32_0 = arith.constant 0 : i32
    %c0_i32_1 = arith.constant 0 : i32
    return %c0_i32, %c0_i32_0 : i32, i32
  }
  func.func @transform_5(%arg0: i32) -> (i32, i32) {
    %c0_i32 = arith.constant 0 : i32
    %c0_i32_0 = arith.constant 0 : i32
    %c0_i32_1 = arith.constant 0 : i32
    return %c0_i32, %c0_i32_0 : i32, i32
  }
  func.func @transform_6(%arg0: i32) -> (i32, i32) {
    %c0_i32 = arith.constant 0 : i32
    %c0_i32_0 = arith.constant 0 : i32
    %c0_i32_1 = arith.constant 0 : i32
    return %c0_i32, %c0_i32_0 : i32, i32
  }
  func.func @transform_7(%arg0: i32) -> (i32, i32, i32) {
    %c0_i32 = arith.constant 0 : i32
    %c0_i32_0 = arith.constant 0 : i32
    %c0_i32_1 = arith.constant 0 : i32
    return %arg0, %c0_i32, %c0_i32_0 : i32, i32, i32
  }
}

</mosaic_0001>

<llo_original>
// kernel: block_forward.3
$region0: #{block_forward.3}
  #allocation0 [shape = 'u32[]', space=smem, size = 0x4, offset = 0x4, fixed_abs, tag = 'smem constant byte address 0x4 - core index']
  #allocation1 [shape = 'u32[72,128]{1,0:T(1,128)}', space=vmem, size = 0x9000, scoped, tag = 'internal scratch']
  %s0 = inlined_call_operand.vmem [shape: bf16[16,32], index: 0, kind: input, shape index: {}]
  %s1 = inlined_call_operand.vmem [shape: f32[1,32], index: 1, kind: input, shape index: {}]
  %s2 = inlined_call_operand.vmem [shape: f32[1,32], index: 2, kind: input, shape index: {}]
  %s3 = inlined_call_operand.vmem [shape: bf16[32,64], index: 3, kind: input, shape index: {}]
  %s4 = inlined_call_operand.vmem [shape: f32[1,64], index: 4, kind: input, shape index: {}]
  %s5 = inlined_call_operand.vmem [shape: bf16[64,64], index: 5, kind: input, shape index: {}]
  %s6 = inlined_call_operand.vmem [shape: f32[1,64], index: 6, kind: input, shape index: {}]
  %s7 = inlined_call_operand.vmem [shape: bf16[64,32], index: 7, kind: input, shape index: {}]
  %s8 = inlined_call_operand.vmem [shape: f32[1,32], index: 8, kind: input, shape index: {}]
  %s9 = inlined_call_operand.hbm [shape: f32[16,32], index: 9, kind: output, shape index: {}]
  %s10 = sld [smem:[#allocation0]]
  $region69: #{block_forward.3} parent=0
    _
  %s12 = ssub.s32 1, %s10
  %s13 = scalar_select 0, %s12, %s10
  $region1: #{block_forward.3} parent=0
    #allocation2 [shape = 'u8[8192]{0}', space=vmem, size = 0x2000, scoped, tag = 'output window, operand 0']
    #allocation3 [shape = 's32[2]{0}', space=sflag, size = 0x8, scoped, tag = 'scoped memory for block_forward.3']
    %14 = vsyncpa [#allocation3], 0
    %s15 = scalar_lea.sflag [#allocation3], 1
    %16 = vsyncpa %s15, 0
    loop: start=0, step=1, limit=4
    $region2: #{block_forward.3} parent=1 // loop_pre_header
      _
    $region3: #{block_forward.3} parent=1 // loop_header
      %s18 = sphi 0, %s22
      %p19 = scmp.ge.s32.totalorder %s18, 4
      %s28 = sphi 0, %s30
      %s31 = sphi 0, %s28
      %s32 = sphi 0, %s31
      %s48 = sphi 0, %s32
      %s52 = sphi 0, %s52
      %s54 = sphi 0, %s52
      %s55 = sphi 0, %s54
      %s69 = sphi 0, %s55
      %s73 = sphi 0, %s73
      %s75 = sphi 0, %s73
      %s76 = sphi 0, %s75
      %s90 = sphi 0, %s76
      %s94 = sphi 0, %s94
      %s96 = sphi 0, %s94
      %s97 = sphi 0, %s96
      %s111 = sphi 0, %s97
      %s115 = sphi 0, %s115
      %s117 = sphi 0, %s115
      %s118 = sphi 0, %s117
      %s132 = sphi 0, %s118
      %s136 = sphi 0, %s136
      %s138 = sphi 0, %s136
      %s139 = sphi 0, %s138
      %s153 = sphi 0, %s139
      %s157 = sphi 0, %s157
      %s159 = sphi 0, %s157
      %s160 = sphi 0, %s159
      %s174 = sphi 0, %s160
      %s178 = sphi 0, %s178
      %s180 = sphi 0, %s178
      %s181 = sphi 0, %s180
      %s195 = sphi 0, %s181
      %s199 = sphi 0, %s199
      %s201 = sphi 0, %s199
      %s202 = sphi 0, %s201
      %s216 = sphi 0, %s202
      %s222 = sphi 0, %s224
      %s225 = sphi 0, %s222
      %s226 = sphi 0, %s225
      %s242 = sphi 0, %s226
    $region4: #{block_forward.3} parent=1 // loop_header_branch
      %21 = sbr.rel (%p19) target = $region8
    $region5: #{block_forward.3} parent=1 // loop_body
      %s23 = ssub.s32 %s18, 1
      %s24 = ssub.s32 %s18, 2
      %s25 = sadd.s32 %s18, 1
      %s26 = ssub.s32 %s18, %s25
      %p27 = scmp.eq.s32.totalorder %s26, 0
      %s29 = sadd.s32 %s28, 1
      %s30 = scalar_select %p27, %s28, %s29
      %p33 = pneg %p27
      %p34 = scmp.eq.s32.totalorder %s18, 1
      %p35 = por %p33, %p34
      %p36 = scmp.ne.s32.totalorder %s28, %s31
      %p37 = scmp.eq.s32.totalorder %s18, 0
      %p38 = por %p36, %p37
      %p39 = scmp.ne.s32.totalorder %s28, %s31
      %p40 = scmp.eq.s32.totalorder %s23, 1
      %p41 = por %p39, %p40
      %p42 = scmp.ne.s32.totalorder %s31, %s32
      %p43 = scmp.eq.s32.totalorder %s23, 0
      %p44 = por %p42, %p43
      %p45 = scmp.ne.s32.totalorder %s31, %s32
      %p46 = scmp.eq.s32.totalorder %s24, 1
      %p47 = por %p45, %p46
      %p49 = scmp.ne.s32.totalorder %s32, %s48
      %p50 = scmp.eq.s32.totalorder %s24, 0
      %p51 = por %p49, %p50
      %s53 = sadd.s32 %s52, 1
      %p56 = scmp.eq.s32.totalorder %s18, 1
      %p57 = scmp.ne.s32.totalorder %s52, %s54
      %p58 = scmp.eq.s32.totalorder %s18, 0
      %p59 = por %p57, %p58
      %p60 = scmp.ne.s32.totalorder %s52, %s54
      %p61 = scmp.eq.s32.totalorder %s23, 1
      %p62 = por %p60, %p61
      %p63 = scmp.ne.s32.totalorder %s54, %s55
      %p64 = scmp.eq.s32.totalorder %s23, 0
      %p65 = por %p63, %p64
      %p66 = scmp.ne.s32.totalorder %s54, %s55
      %p67 = scmp.eq.s32.totalorder %s24, 1
      %p68 = por %p66, %p67
      %p70 = scmp.ne.s32.totalorder %s55, %s69
      %p71 = scmp.eq.s32.totalorder %s24, 0
      %p72 = por %p70, %p71
      %s74 = sadd.s32 %s73, 1
      %p77 = scmp.eq.s32.totalorder %s18, 1
      %p78 = scmp.ne.s32.totalorder %s73, %s75
      %p79 = scmp.eq.s32.totalorder %s18, 0
      %p80 = por %p78, %p79
      %p81 = scmp.ne.s32.totalorder %s73, %s75
      %p82 = scmp.eq.s32.totalorder %s23, 1
      %p83 = por %p81, %p82
      %p84 = scmp.ne.s32.totalorder %s75, %s76
      %p85 = scmp.eq.s32.totalorder %s23, 0
      %p86 = por %p84, %p85
      %p87 = scmp.ne.s32.totalorder %s75, %s76
      %p88 = scmp.eq.s32.totalorder %s24, 1
      %p89 = por %p87, %p88
      %p91 = scmp.ne.s32.totalorder %s76, %s90
      %p92 = scmp.eq.s32.totalorder %s24, 0
      %p93 = por %p91, %p92
      %s95 = sadd.s32 %s94, 1
      %p98 = scmp.eq.s32.totalorder %s18, 1
      %p99 = scmp.ne.s32.totalorder %s94, %s96
      %p100 = scmp.eq.s32.totalorder %s18, 0
      %p101 = por %p99, %p100
      %p102 = scmp.ne.s32.totalorder %s94, %s96
      %p103 = scmp.eq.s32.totalorder %s23, 1
      %p104 = por %p102, %p103
      %p105 = scmp.ne.s32.totalorder %s96, %s97
      %p106 = scmp.eq.s32.totalorder %s23, 0
      %p107 = por %p105, %p106
      %p108 = scmp.ne.s32.totalorder %s96, %s97
      %p109 = scmp.eq.s32.totalorder %s24, 1
      %p110 = por %p108, %p109
      %p112 = scmp.ne.s32.totalorder %s97, %s111
      %p113 = scmp.eq.s32.totalorder %s24, 0
      %p114 = por %p112, %p113
      %s116 = sadd.s32 %s115, 1
      %p119 = scmp.eq.s32.totalorder %s18, 1
      %p120 = scmp.ne.s32.totalorder %s115, %s117
      %p121 = scmp.eq.s32.totalorder %s18, 0
      %p122 = por %p120, %p121
      %p123 = scmp.ne.s32.totalorder %s115, %s117
      %p124 = scmp.eq.s32.totalorder %s23, 1
      %p125 = por %p123, %p124
      %p126 = scmp.ne.s32.totalorder %s117, %s118
      %p127 = scmp.eq.s32.totalorder %s23, 0
      %p128 = por %p126, %p127
      %p129 = scmp.ne.s32.totalorder %s117, %s118
      %p130 = scmp.eq.s32.totalorder %s24, 1
      %p131 = por %p129, %p130
      %p133 = scmp.ne.s32.totalorder %s118, %s132
      %p134 = scmp.eq.s32.totalorder %s24, 0
      %p135 = por %p133, %p134
      %s137 = sadd.s32 %s136, 1
      %p140 = scmp.eq.s32.totalorder %s18, 1
      %p141 = scmp.ne.s32.totalorder %s136, %s138
      %p142 = scmp.eq.s32.totalorder %s18, 0
      %p143 = por %p141, %p142
      %p144 = scmp.ne.s32.totalorder %s136, %s138
      %p145 = scmp.eq.s32.totalorder %s23, 1
      %p146 = por %p144, %p145
      %p147 = scmp.ne.s32.totalorder %s138, %s139
      %p148 = scmp.eq.s32.totalorder %s23, 0
      %p149 = por %p147, %p148
      %p150 = scmp.ne.s32.totalorder %s138, %s139
      %p151 = scmp.eq.s32.totalorder %s24, 1
      %p152 = por %p150, %p151
      %p154 = scmp.ne.s32.totalorder %s139, %s153
      %p155 = scmp.eq.s32.totalorder %s24, 0
      %p156 = por %p154, %p155
      %s158 = sadd.s32 %s157, 1
      %p161 = scmp.eq.s32.totalorder %s18, 1
      %p162 = scmp.ne.s32.totalorder %s157, %s159
      %p163 = scmp.eq.s32.totalorder %s18, 0
      %p164 = por %p162, %p163
      %p165 = scmp.ne.s32.totalorder %s157, %s159
      %p166 = scmp.eq.s32.totalorder %s23, 1
      %p167 = por %p165, %p166
      %p168 = scmp.ne.s32.totalorder %s159, %s160
      %p169 = scmp.eq.s32.totalorder %s23, 0
      %p170 = por %p168, %p169
      %p171 = scmp.ne.s32.totalorder %s159, %s160
      %p172 = scmp.eq.s32.totalorder %s24, 1
      %p173 = por %p171, %p172
      %p175 = scmp.ne.s32.totalorder %s160, %s174
      %p176 = scmp.eq.s32.totalorder %s24, 0
      %p177 = por %p175, %p176
      %s179 = sadd.s32 %s178, 1
      %p182 = scmp.eq.s32.totalorder %s18, 1
      %p183 = scmp.ne.s32.totalorder %s178, %s180
      %p184 = scmp.eq.s32.totalorder %s18, 0
      %p185 = por %p183, %p184
      %p186 = scmp.ne.s32.totalorder %s178, %s180
      %p187 = scmp.eq.s32.totalorder %s23, 1
      %p188 = por %p186, %p187
      %p189 = scmp.ne.s32.totalorder %s180, %s181
      %p190 = scmp.eq.s32.totalorder %s23, 0
      %p191 = por %p189, %p190
      %p192 = scmp.ne.s32.totalorder %s180, %s181
      %p193 = scmp.eq.s32.totalorder %s24, 1
      %p194 = por %p192, %p193
      %p196 = scmp.ne.s32.totalorder %s181, %s195
      %p197 = scmp.eq.s32.totalorder %s24, 0
      %p198 = por %p196, %p197
      %s200 = sadd.s32 %s199, 1
      %p203 = scmp.eq.s32.totalorder %s18, 1
      %p204 = scmp.ne.s32.totalorder %s199, %s201
      %p205 = scmp.eq.s32.totalorder %s18, 0
      %p206 = por %p204, %p205
      %p207 = scmp.ne.s32.totalorder %s199, %s201
      %p208 = scmp.eq.s32.totalorder %s23, 1
      %p209 = por %p207, %p208
      %p210 = scmp.ne.s32.totalorder %s201, %s202
      %p211 = scmp.eq.s32.totalorder %s23, 0
      %p212 = por %p210, %p211
      %p213 = scmp.ne.s32.totalorder %s201, %s202
      %p214 = scmp.eq.s32.totalorder %s24, 1
      %p215 = por %p213, %p214
      %p217 = scmp.ne.s32.totalorder %s202, %s216
      %p218 = scmp.eq.s32.totalorder %s24, 0
      %p219 = por %p217, %p218
      %s220 = ssub.s32 %s18, %s25
      %p221 = scmp.eq.s32.totalorder %s220, 0
      %s223 = sadd.s32 %s222, 1
      %s224 = scalar_select %p221, %s222, %s223
      %p227 = pneg %p221
      %p228 = scmp.eq.s32.totalorder %s18, 1
      %p229 = por %p227, %p228
      %p230 = scmp.ne.s32.totalorder %s222, %s225
      %p231 = scmp.eq.s32.totalorder %s18, 0
      %p232 = por %p230, %p231
      %p233 = scmp.ne.s32.totalorder %s222, %s225
      %p234 = scmp.eq.s32.totalorder %s23, 1
      %p235 = por %p233, %p234
      %p236 = scmp.ne.s32.totalorder %s225, %s226
      %p237 = scmp.eq.s32.totalorder %s23, 0
      %p238 = por %p236, %p237
      %p239 = scmp.ne.s32.totalorder %s225, %s226
      %p240 = scmp.eq.s32.totalorder %s24, 1
      %p241 = por %p239, %p240
      %p243 = scmp.ne.s32.totalorder %s226, %s242
      %p244 = scmp.eq.s32.totalorder %s24, 0
      %p245 = por %p243, %p244
      %p246 = scmp.le.s32.totalorder 1, %s18
      %p247 = scmp.lt.s32.totalorder %s18, 3
      %p248 = pnand %p246, %p247
      %p249 = pneg %p248
      // Predicated region
      $region9: #{block_forward.3} parent=5 // pred_check
        _
      $region10: #{block_forward.3} parent=5 // pred_check_branch
        %251 = sbr.rel (%p248) target = $region12
      $region11: #{block_forward.3} parent=5 // pred_region
        %s252 = ssub.s32 %s18, 1
        // Predicated region
        $region13: #{block_forward.3} parent=11 // pred_check
          %p253 = pneg %p65
        $region14: #{block_forward.3} parent=11 // pred_check_branch
          %255 = sbr.rel (%p253) target = $region16
        $region15: #{block_forward.3} parent=11 // pred_region
          _
        $region16: #{block_forward.3} parent=11 // pred_fallthru
          _
        // Predicated region
        $region17: #{block_forward.3} parent=11 // pred_check
          %p256 = pneg %p86
        $region18: #{block_forward.3} parent=11 // pred_check_branch
          %258 = sbr.rel (%p256) target = $region20
        $region19: #{block_forward.3} parent=11 // pred_region
          _
        $region20: #{block_forward.3} parent=11 // pred_fallthru
          _
        // Predicated region
        $region21: #{block_forward.3} parent=11 // pred_check
          %p259 = pneg %p107
        $region22: #{block_forward.3} parent=11 // pred_check_branch
          %261 = sbr.rel (%p259) target = $region24
        $region23: #{block_forward.3} parent=11 // pred_region
          _
        $region24: #{block_forward.3} parent=11 // pred_fallthru
          _
        // Predicated region
        $region25: #{block_forward.3} parent=11 // pred_check
          %p262 = pneg %p128
        $region26: #{block_forward.3} parent=11 // pred_check_branch
          %264 = sbr.rel (%p262) target = $region28
        $region27: #{block_forward.3} parent=11 // pred_region
          _
        $region28: #{block_forward.3} parent=11 // pred_fallthru
          _
        // Predicated region
        $region29: #{block_forward.3} parent=11 // pred_check
          %p265 = pneg %p149
        $region30: #{block_forward.3} parent=11 // pred_check_branch
          %267 = sbr.rel (%p265) target = $region32
        $region31: #{block_forward.3} parent=11 // pred_region
          _
        $region32: #{block_forward.3} parent=11 // pred_fallthru
          _
        // Predicated region
        $region33: #{block_forward.3} parent=11 // pred_check
          %p268 = pneg %p170
        $region34: #{block_forward.3} parent=11 // pred_check_branch
          %270 = sbr.rel (%p268) target = $region36
        $region35: #{block_forward.3} parent=11 // pred_region
          _
        $region36: #{block_forward.3} parent=11 // pred_fallthru
          _
        // Predicated region
        $region37: #{block_forward.3} parent=11 // pred_check
          %p271 = pneg %p191
        $region38: #{block_forward.3} parent=11 // pred_check_branch
          %273 = sbr.rel (%p271) target = $region40
        $region39: #{block_forward.3} parent=11 // pred_region
          _
        $region40: #{block_forward.3} parent=11 // pred_fallthru
          _
        // Predicated region
        $region41: #{block_forward.3} parent=11 // pred_check
          %p274 = pneg %p212
        $region42: #{block_forward.3} parent=11 // pred_check_branch
          %276 = sbr.rel (%p274) target = $region44
        $region43: #{block_forward.3} parent=11 // pred_region
          _
        $region44: #{block_forward.3} parent=11 // pred_fallthru
          _
      $region12: #{block_forward.3} parent=5 // pred_fallthru
        _
      %p277 = scmp.lt.s32.totalorder %s18, 2
      // Predicated region
      $region45: #{block_forward.3} parent=5 // pred_check
        %p278 = pneg %p277
      $region46: #{block_forward.3} parent=5 // pred_check_branch
        %280 = sbr.rel (%p278) target = $region48
      $region47: #{block_forward.3} parent=5 // pred_region
        // Predicated region
        $region49: #{block_forward.3} parent=47 // pred_check
          %p281 = pneg %p38
        $region50: #{block_forward.3} parent=47 // pred_check_branch
          %283 = sbr.rel (%p281) target = $region52
        $region51: #{block_forward.3} parent=47 // pred_region
          %p284 = scmp.lt.s32.totalorder %s18, 1
          %s285 = scalar_select %p284, %s18, 1
          %s286 = smul.addr %s285, 4
          %s287 = scalar_lea.vmem %s0, %s286
        $region52: #{block_forward.3} parent=47 // pred_fallthru
          _
      $region48: #{block_forward.3} parent=5 // pred_fallthru
        _
      %p288 = scmp.le.s32.totalorder 1, %s18
      %p289 = scmp.lt.s32.totalorder %s18, 3
      %p290 = pnand %p288, %p289
      %p291 = pneg %p290
      // Predicated region
      $region53: #{block_forward.3} parent=5 // pred_check
        _
      $region54: #{block_forward.3} parent=5 // pred_check_branch
        %293 = sbr.rel (%p290) target = $region56
      $region55: #{block_forward.3} parent=5 // pred_region
        %s294 = ssub.s32 %s18, 1
        %p295 = scmp.lt.s32.totalorder %s23, 1
        %s296 = scalar_select %p295, %s23, 1
        %s297 = smul.addr %s296, 4
        %s298 = scalar_lea.vmem %s0, %s297
        %p299 = pneg %p44
        %p300 = pneg %p41
        %p301 = pneg %p65
        %p302 = pneg %p62
        %p303 = pneg %p86
        %p304 = pneg %p83
        %p305 = pneg %p107
        %p306 = pneg %p104
        %p307 = pneg %p128
        %p308 = pneg %p125
        %p309 = pneg %p149
        %p310 = pneg %p146
        %p311 = pneg %p170
        %p312 = pneg %p167
        %p313 = pneg %p191
        %p314 = pneg %p188
        %p315 = pneg %p212
        %p316 = pneg %p209
        %p317 = pneg %p238
        %p318 = pneg %p235
        %s319 = sand.u32 %s225, 1
        %s320 = scalar_lea.sflag [#allocation3], %s319
        %s321 = sand.u32 %s225, 1
        %s322 = smul.addr %s321, 8
        %s323 = scalar_lea.vmem [#allocation2], %s322
        %p324 = scmp.lt.s32.totalorder %s23, 1
        %s325 = scalar_select %p324, %s23, 1
        %s326 = smul.addr %s325, 4
        %s327 = scalar_lea.vmem %s0, %s326
        %v329 = vld [vmem:[%s327] sm:$0xf]
        %v330 = vunpack.c.l.bf16 %v329
        %vm331 = vcmask 261120
        %v332 = vsel %vm331, %v330, 0.0
        %333 = vadd.xlane.f32.xlu0 %v332
        %v334 = vpop.xlane.xlu0 %333
        %v335 = vrcp.pop 32.0
        %v336 = vmul.f32 32.0, %v335
        %v337 = vsub.f32 1.0, %v336
        %v338 = vmul.f32 %v335, %v337
        %v339 = vadd.f32 %v335, %v338
        %vm340 = vweird.f32 %v335
        %v341 = vsel %vm340, %v335, %v339
        %v342 = vmul.f32 %v334, %v341
        %v343 = vsub.f32 %v330, %v342
        %v344 = vmul.f32 %v343, %v343
        %v345 = vsel %vm331, %v344, 0.0
        %346 = vadd.xlane.f32.xlu0 %v345
        %v347 = vpop.xlane.xlu0 %346
        %v348 = vmul.f32 %v347, %v341
        %v349 = vadd.f32 %v348, 1e-05
        %v350 = vrsqrt.pop %v349
        %v351 = vmul.f32 %v350, %v349
        %v352 = vmul.f32 %v351, %v350
        %v353 = vmul.f32 0.5, %v352
        %v354 = vsub.f32 1.5, %v353
        %v355 = vmul.f32 %v350, %v354
        %vm356 = vweird.f32 %v349
        %vm357 = vweird.f32 %v350
        %vm358 = vmor %vm356, %vm357
        %v359 = vsel %vm358, %v350, %v355
        %v360 = vmul.f32 %v343, %v359
        %v361 = vld [vmem:[%s1] sm:$0x1]
        %v363 = vperm.slane %v361, 0
        %v365 = vmul.f32 %v360, %v363
        %v366 = vld [vmem:[%s2] sm:$0x1]
        %v368 = vperm.slane %v366, 0
        %v370 = vadd.f32 %v365, %v368
        %v371 = vpack.c.bf16 %v370, %v370
        %v372 = vld [vmem:[%s3] sm:$0xf]
        %v373 = vld [vmem:[%s3 + $0x4] sm:$0xf]
        %v374 = vld [vmem:[%s3 + $0x8] sm:$0xf]
        %v375 = vld [vmem:[%s3 + $0xc] sm:$0xf]
        %v376 = vld [vmem:[%s4] sm:$0x1]
        %v378 = vperm.slane %v376, 0
        %v384 = vunpack.c.l.b16 %v372
        %v385 = vunpack.c.l.b16 %v373
        %v386 = vunpack.c.l.b16 %v374
        %v387 = vunpack.c.l.b16 %v375
        %v388 = vpack.c.b16 %v385, %v384
        %v389 = vpack.c.b16 %v387, %v386
        %v393 = vsel %vm331, %v371, 0
        %395 = vmatpush.bf16.msra.mxu0 0
        %396 = vmatpush.bf16.msra.mxu0 0
        %397 = vmatpush.bf16.msra.mxu0 0
        %398 = vmatpush.bf16.msra.mxu0 0
        %399 = vmatpush.bf16.msra.mxu0 0
        %400 = vmatpush.bf16.msra.mxu0 0
        %401 = vmatpush.bf16.msra.mxu0 %v389
        %402 = vmatpush.bf16.msra.mxu0 %v388
        %403 = vmatmul.bf16.gmra.mxu0 %v393
        %v404 = vpop.f32.mrf.mxu0
        %v405 = vadd.f32 %v378, %v404
        %v406 = vpop.f32.mrf.mxu0
        %407 = vdwg.mxu0
        %v408 = vmax.f32 %v405, 0.0
        %v409 = vpack.c.bf16 %v408, %v408
        %v410 = vld [vmem:[%s5] sm:$0xf]
        %v411 = vld [vmem:[%s5 + $0x4] sm:$0xf]
        %v412 = vld [vmem:[%s5 + $0x8] sm:$0xf]
        %v413 = vld [vmem:[%s5 + $0xc] sm:$0xf]
        %v414 = vld [vmem:[%s5 + $0x10] sm:$0xf]
        %v415 = vld [vmem:[%s5 + $0x14] sm:$0xf]
        %v416 = vld [vmem:[%s5 + $0x18] sm:$0xf]
        %v417 = vld [vmem:[%s5 + $0x1c] sm:$0xf]
        %v418 = vld [vmem:[%s6] sm:$0x1]
        %v420 = vperm.slane %v418, 0
        %v430 = vunpack.c.l.b16 %v410
        %v431 = vunpack.c.l.b16 %v411
        %v432 = vunpack.c.l.b16 %v412
        %v433 = vunpack.c.l.b16 %v413
        %v434 = vunpack.c.l.b16 %v414
        %v435 = vunpack.c.l.b16 %v415
        %v436 = vunpack.c.l.b16 %v416
        %v437 = vunpack.c.l.b16 %v417
        %v438 = vpack.c.b16 %v431, %v430
        %v439 = vpack.c.b16 %v433, %v432
        %v440 = vpack.c.b16 %v435, %v434
        %v441 = vpack.c.b16 %v437, %v436
        %vm446 = vcmask 523264
        %v448 = vsel %vm446, %v409, 0
        %450 = vmatpush.bf16.msra.mxu0 0
        %451 = vmatpush.bf16.msra.mxu0 0
        %452 = vmatpush.bf16.msra.mxu0 0
        %453 = vmatpush.bf16.msra.mxu0 0
        %454 = vmatpush.bf16.msra.mxu0 %v441
        %455 = vmatpush.bf16.msra.mxu0 %v440
        %456 = vmatpush.bf16.msra.mxu0 %v439
        %457 = vmatpush.bf16.msra.mxu0 %v438
        %458 = vmatmul.bf16.gmra.mxu0 %v448
        %v459 = vpop.f32.mrf.mxu0
        %v460 = vadd.f32 %v420, %v459
        %v461 = vpop.f32.mrf.mxu0
        %462 = vdwg.mxu0
        %v463 = vmax.f32 %v460, 0.0
        %v464 = vpack.c.bf16 %v463, %v463
        %v465 = vld [vmem:[%s7] sm:$0xf]
        %v466 = vld [vmem:[%s7 + $0x4] sm:$0xf]
        %v467 = vld [vmem:[%s7 + $0x8] sm:$0xf]
        %v468 = vld [vmem:[%s7 + $0xc] sm:$0xf]
        %v469 = vld [vmem:[%s7 + $0x10] sm:$0xf]
        %v470 = vld [vmem:[%s7 + $0x14] sm:$0xf]
        %v471 = vld [vmem:[%s7 + $0x18] sm:$0xf]
        %v472 = vld [vmem:[%s7 + $0x1c] sm:$0xf]
        %v473 = vld [vmem:[%s8] sm:$0x1]
        %v475 = vperm.slane %v473, 0
        %v485 = vunpack.c.l.b16 %v465
        %v486 = vunpack.c.l.b16 %v466
        %v487 = vunpack.c.l.b16 %v467
        %v488 = vunpack.c.l.b16 %v468
        %v489 = vunpack.c.l.b16 %v469
        %v490 = vunpack.c.l.b16 %v470
        %v491 = vunpack.c.l.b16 %v471
        %v492 = vunpack.c.l.b16 %v472
        %v493 = vpack.c.b16 %v486, %v485
        %v494 = vpack.c.b16 %v488, %v487
        %v495 = vpack.c.b16 %v490, %v489
        %v496 = vpack.c.b16 %v492, %v491
        %v502 = vsel %vm446, %v464, 0
        %504 = vmatpush.bf16.msra.mxu0 0
        %505 = vmatpush.bf16.msra.mxu0 0
        %506 = vmatpush.bf16.msra.mxu0 0
        %507 = vmatpush.bf16.msra.mxu0 0
        %508 = vmatpush.bf16.msra.mxu0 %v496
        %509 = vmatpush.bf16.msra.mxu0 %v495
        %510 = vmatpush.bf16.msra.mxu0 %v494
        %511 = vmatpush.bf16.msra.mxu0 %v493
        %512 = vmatmul.bf16.gmra.mxu0 %v502
        %v513 = vpop.f32.mrf.mxu0
        %v514 = vadd.f32 %v475, %v513
        %v515 = vpop.f32.mrf.mxu0
        %516 = vdwg.mxu0
        %v517 = vadd.f32 %v330, %v514
        %518 = vst.msk [vmem:[%s323] sm:$0xff] %vm331, %v517
        %s519 = sand.u32 %s225, 1
        %s520 = scalar_lea.sflag [#allocation3], %s519
        %s521 = sand.u32 %s225, 1
        %s522 = smul.addr %s521, 8
        %s523 = scalar_lea.vmem [#allocation2], %s522
        // Predicated region
        $region57: #{block_forward.3} parent=55 // pred_check
          %p524 = pneg %p235
        $region58: #{block_forward.3} parent=55 // pred_check_branch
          %526 = sbr.rel (%p524) target = $region60
        $region59: #{block_forward.3} parent=55 // pred_region
          %528 = vsyncadd %s520, 0
          %s529 = smul.addr %s23, 8
          %s530 = scalar_lea.hbm %s9, %s529
          %s532 = sshll.u32 %s523, 4
          %s533 = int_to_ptr.vmem [resolvable:$true] %s532
          %s534 = sshll.u32 %s530, 4
          %s535 = int_to_ptr.hbm [resolvable:$true] %s534
          %537 = dma.vmem_to_hbm [thread:$0]  %s533, 128, %s535, %s520
        $region60: #{block_forward.3} parent=55 // pred_fallthru
          _
      $region56: #{block_forward.3} parent=5 // pred_fallthru
        _
      %p538 = scmp.le.s32.totalorder 2, %s18
      // Predicated region
      $region61: #{block_forward.3} parent=5 // pred_check
        %p539 = pneg %p538
      $region62: #{block_forward.3} parent=5 // pred_check_branch
        %541 = sbr.rel (%p539) target = $region64
      $region63: #{block_forward.3} parent=5 // pred_region
        %s542 = ssub.s32 %s18, 2
        // Predicated region
        $region65: #{block_forward.3} parent=63 // pred_check
          %p543 = pneg %p241
        $region66: #{block_forward.3} parent=63 // pred_check_branch
          %545 = sbr.rel (%p543) target = $region68
        $region67: #{block_forward.3} parent=63 // pred_region
          %s546 = sand.u32 %s226, 1
          %s547 = scalar_lea.sflag [#allocation3], %s546
          %s548 = sand.u32 %s226, 1
          %s549 = smul.addr %s548, 8
          %s550 = scalar_lea.vmem [#allocation2], %s549
          %552 = dma.done %s547, 128
        $region68: #{block_forward.3} parent=63 // pred_fallthru
          _
      $region64: #{block_forward.3} parent=5 // pred_fallthru
        _
    $region6: #{block_forward.3} parent=1 // loop_footer
      %s22 = sadd.s32 1, %s18
    $region7: #{block_forward.3} parent=1 // loop_footer_branch
      %17 = sbr.rel target = $region3
    $region8: #{block_forward.3} parent=1 // loop_exit
      _
    %553 = vsyncpa [#allocation3], 1
    %s554 = scalar_lea.sflag [#allocation3], 1
    %555 = vsyncpa %s554, 1

// kernel: block_forward.2
$region0: #{block_forward.2}
  #allocation0 [shape = 'u32[]', space=smem, size = 0x4, offset = 0x4, fixed_abs, tag = 'smem constant byte address 0x4 - core index']
  #allocation1 [shape = 'u32[72,128]{1,0:T(1,128)}', space=vmem, size = 0x9000, scoped, tag = 'internal scratch']
  #allocation2 [shape = 'f32[8,32]{1,0:T(8,128)}', space=vmem, size = 0x1000, scoped, tag = 'scratch operand']
  %s0 = inlined_call_operand.hbm [shape: f32[2,8,32], index: 0, kind: input, shape index: {}]
  %s1 = inlined_call_operand.vmem [shape: f32[1,32], index: 1, kind: input, shape index: {}]
  %s2 = inlined_call_operand.vmem [shape: f32[1,32], index: 2, kind: input, shape index: {}]
  %s3 = inlined_call_operand.hbm [shape: bf16[32,96], index: 3, kind: input, shape index: {}]
  %s4 = inlined_call_operand.hbm [shape: f32[1,96], index: 4, kind: input, shape index: {}]
  %s5 = inlined_call_operand.hbm [shape: bf16[32,32], index: 5, kind: input, shape index: {}]
  %s6 = inlined_call_operand.hbm [shape: f32[1,32], index: 6, kind: input, shape index: {}]
  %s7 = inlined_call_operand.vmem [shape: bf16[2,8,32], index: 7, kind: output, shape index: {}]
  %s8 = sld [smem:[#allocation0]]
  $region81: #{block_forward.2} parent=0
    _
  %s10 = ssub.s32 1, %s8
  %s11 = scalar_select 0, %s10, %s8
  $region1: #{block_forward.2} parent=0
    #allocation3 [shape = 'u8[8192]{0}', space=vmem, size = 0x2000, scoped, tag = 'input window, operand 0']
    #allocation4 [shape = 's32[2]{0}', space=sflag, size = 0x8, scoped, tag = 'scoped memory for block_forward.2']
    #allocation5 [shape = 'u8[8192]{0}', space=vmem, size = 0x2000, scoped, tag = 'input window, operand 3, single buffered']
    #allocation6 [shape = 's32[1]{0}', space=sflag, size = 0x4, scoped, tag = 'scoped memory for block_forward.2']
    #allocation7 [shape = 'u8[512]{0}', space=vmem, size = 0x400, scoped, tag = 'input window, operand 4, single buffered']
    #allocation8 [shape = 'u8[8192]{0}', space=vmem, size = 0x2000, scoped, tag = 'input window, operand 5, single buffered']
    #allocation9 [shape = 's32[1]{0}', space=sflag, size = 0x4, scoped, tag = 'scoped memory for block_forward.2']
    #allocation10 [shape = 'u8[512]{0}', space=vmem, size = 0x400, scoped, tag = 'input window, operand 6, single buffered']
    %12 = vsyncpa [#allocation4], 0
    %s13 = scalar_lea.sflag [#allocation4], 1
    %14 = vsyncpa %s13, 0
    %15 = vsyncpa [#allocation6], 0
    %16 = vsyncpa [#allocation9], 0
    loop: start=0, step=1, limit=4
    $region2: #{block_forward.2} parent=1 // loop_pre_header
      _
    $region3: #{block_forward.2} parent=1 // loop_header
      %s18 = sphi 0, %s22
      %p19 = scmp.ge.s32.totalorder %s18, 4
      %s28 = sphi 0, %s30
      %s31 = sphi 0, %s28
      %s32 = sphi 0, %s31
      %s48 = sphi 0, %s32
      %s52 = sphi 0, %s52
      %s54 = sphi 0, %s52
      %s55 = sphi 0, %s54
      %s69 = sphi 0, %s55
      %s73 = sphi 0, %s73
      %s75 = sphi 0, %s73
      %s76 = sphi 0, %s75
      %s90 = sphi 0, %s76
      %s94 = sphi 0, %s94
      %s96 = sphi 0, %s94
      %s97 = sphi 0, %s96
      %s111 = sphi 0, %s97
      %s115 = sphi 0, %s115
      %s117 = sphi 0, %s115
      %s118 = sphi 0, %s117
      %s132 = sphi 0, %s118
      %s136 = sphi 0, %s136
      %s138 = sphi 0, %s136
      %s139 = sphi 0, %s138
      %s153 = sphi 0, %s139
      %s157 = sphi 0, %s157
      %s159 = sphi 0, %s157
      %s160 = sphi 0, %s159
      %s174 = sphi 0, %s160
      %s180 = sphi 0, %s182
      %s183 = sphi 0, %s180
      %s184 = sphi 0, %s183
      %s200 = sphi 0, %s184
    $region4: #{block_forward.2} parent=1 // loop_header_branch
      %21 = sbr.rel (%p19) target = $region8
    $region5: #{block_forward.2} parent=1 // loop_body
      %s23 = ssub.s32 %s18, 1
      %s24 = ssub.s32 %s18, 2
      %s25 = sadd.s32 %s18, 1
      %s26 = ssub.s32 %s18, %s25
      %p27 = scmp.eq.s32.totalorder %s26, 0
      %s29 = sadd.s32 %s28, 1
      %s30 = scalar_select %p27, %s28, %s29
      %p33 = pneg %p27
      %p34 = scmp.eq.s32.totalorder %s18, 1
      %p35 = por %p33, %p34
      %p36 = scmp.ne.s32.totalorder %s28, %s31
      %p37 = scmp.eq.s32.totalorder %s18, 0
      %p38 = por %p36, %p37
      %p39 = scmp.ne.s32.totalorder %s28, %s31
      %p40 = scmp.eq.s32.totalorder %s23, 1
      %p41 = por %p39, %p40
      %p42 = scmp.ne.s32.totalorder %s31, %s32
      %p43 = scmp.eq.s32.totalorder %s23, 0
      %p44 = por %p42, %p43
      %p45 = scmp.ne.s32.totalorder %s31, %s32
      %p46 = scmp.eq.s32.totalorder %s24, 1
      %p47 = por %p45, %p46
      %p49 = scmp.ne.s32.totalorder %s32, %s48
      %p50 = scmp.eq.s32.totalorder %s24, 0
      %p51 = por %p49, %p50
      %s53 = sadd.s32 %s52, 1
      %p56 = scmp.eq.s32.totalorder %s18, 1
      %p57 = scmp.ne.s32.totalorder %s52, %s54
      %p58 = scmp.eq.s32.totalorder %s18, 0
      %p59 = por %p57, %p58
      %p60 = scmp.ne.s32.totalorder %s52, %s54
      %p61 = scmp.eq.s32.totalorder %s23, 1
      %p62 = por %p60, %p61
      %p63 = scmp.ne.s32.totalorder %s54, %s55
      %p64 = scmp.eq.s32.totalorder %s23, 0
      %p65 = por %p63, %p64
      %p66 = scmp.ne.s32.totalorder %s54, %s55
      %p67 = scmp.eq.s32.totalorder %s24, 1
      %p68 = por %p66, %p67
      %p70 = scmp.ne.s32.totalorder %s55, %s69
      %p71 = scmp.eq.s32.totalorder %s24, 0
      %p72 = por %p70, %p71
      %s74 = sadd.s32 %s73, 1
      %p77 = scmp.eq.s32.totalorder %s18, 1
      %p78 = scmp.ne.s32.totalorder %s73, %s75
      %p79 = scmp.eq.s32.totalorder %s18, 0
      %p80 = por %p78, %p79
      %p81 = scmp.ne.s32.totalorder %s73, %s75
      %p82 = scmp.eq.s32.totalorder %s23, 1
      %p83 = por %p81, %p82
      %p84 = scmp.ne.s32.totalorder %s75, %s76
      %p85 = scmp.eq.s32.totalorder %s23, 0
      %p86 = por %p84, %p85
      %p87 = scmp.ne.s32.totalorder %s75, %s76
      %p88 = scmp.eq.s32.totalorder %s24, 1
      %p89 = por %p87, %p88
      %p91 = scmp.ne.s32.totalorder %s76, %s90
      %p92 = scmp.eq.s32.totalorder %s24, 0
      %p93 = por %p91, %p92
      %s95 = sadd.s32 %s94, 1
      %p98 = scmp.eq.s32.totalorder %s18, 1
      %p99 = scmp.ne.s32.totalorder %s94, %s96
      %p100 = scmp.eq.s32.totalorder %s18, 0
      %p101 = por %p99, %p100
      %p102 = scmp.ne.s32.totalorder %s94, %s96
      %p103 = scmp.eq.s32.totalorder %s23, 1
      %p104 = por %p102, %p103
      %p105 = scmp.ne.s32.totalorder %s96, %s97
      %p106 = scmp.eq.s32.totalorder %s23, 0
      %p107 = por %p105, %p106
      %p108 = scmp.ne.s32.totalorder %s96, %s97
      %p109 = scmp.eq.s32.totalorder %s24, 1
      %p110 = por %p108, %p109
      %p112 = scmp.ne.s32.totalorder %s97, %s111
      %p113 = scmp.eq.s32.totalorder %s24, 0
      %p114 = por %p112, %p113
      %s116 = sadd.s32 %s115, 1
      %p119 = scmp.eq.s32.totalorder %s18, 1
      %p120 = scmp.ne.s32.totalorder %s115, %s117
      %p121 = scmp.eq.s32.totalorder %s18, 0
      %p122 = por %p120, %p121
      %p123 = scmp.ne.s32.totalorder %s115, %s117
      %p124 = scmp.eq.s32.totalorder %s23, 1
      %p125 = por %p123, %p124
      %p126 = scmp.ne.s32.totalorder %s117, %s118
      %p127 = scmp.eq.s32.totalorder %s23, 0
      %p128 = por %p126, %p127
      %p129 = scmp.ne.s32.totalorder %s117, %s118
      %p130 = scmp.eq.s32.totalorder %s24, 1
      %p131 = por %p129, %p130
      %p133 = scmp.ne.s32.totalorder %s118, %s132
      %p134 = scmp.eq.s32.totalorder %s24, 0
      %p135 = por %p133, %p134
      %s137 = sadd.s32 %s136, 1
      %p140 = scmp.eq.s32.totalorder %s18, 1
      %p141 = scmp.ne.s32.totalorder %s136, %s138
      %p142 = scmp.eq.s32.totalorder %s18, 0
      %p143 = por %p141, %p142
      %p144 = scmp.ne.s32.totalorder %s136, %s138
      %p145 = scmp.eq.s32.totalorder %s23, 1
      %p146 = por %p144, %p145
      %p147 = scmp.ne.s32.totalorder %s138, %s139
      %p148 = scmp.eq.s32.totalorder %s23, 0
      %p149 = por %p147, %p148
      %p150 = scmp.ne.s32.totalorder %s138, %s139
      %p151 = scmp.eq.s32.totalorder %s24, 1
      %p152 = por %p150, %p151
      %p154 = scmp.ne.s32.totalorder %s139, %s153
      %p155 = scmp.eq.s32.totalorder %s24, 0
      %p156 = por %p154, %p155
      %s158 = sadd.s32 %s157, 1
      %p161 = scmp.eq.s32.totalorder %s18, 1
      %p162 = scmp.ne.s32.totalorder %s157, %s159
      %p163 = scmp.eq.s32.totalorder %s18, 0
      %p164 = por %p162, %p163
      %p165 = scmp.ne.s32.totalorder %s157, %s159
      %p166 = scmp.eq.s32.totalorder %s23, 1
      %p167 = por %p165, %p166
      %p168 = scmp.ne.s32.totalorder %s159, %s160
      %p169 = scmp.eq.s32.totalorder %s23, 0
      %p170 = por %p168, %p169
      %p171 = scmp.ne.s32.totalorder %s159, %s160
      %p172 = scmp.eq.s32.totalorder %s24, 1
      %p173 = por %p171, %p172
      %p175 = scmp.ne.s32.totalorder %s160, %s174
      %p176 = scmp.eq.s32.totalorder %s24, 0
      %p177 = por %p175, %p176
      %s178 = ssub.s32 %s18, %s25
      %p179 = scmp.eq.s32.totalorder %s178, 0
      %s181 = sadd.s32 %s180, 1
      %s182 = scalar_select %p179, %s180, %s181
      %p185 = pneg %p179
      %p186 = scmp.eq.s32.totalorder %s18, 1
      %p187 = por %p185, %p186
      %p188 = scmp.ne.s32.totalorder %s180, %s183
      %p189 = scmp.eq.s32.totalorder %s18, 0
      %p190 = por %p188, %p189
      %p191 = scmp.ne.s32.totalorder %s180, %s183
      %p192 = scmp.eq.s32.totalorder %s23, 1
      %p193 = por %p191, %p192
      %p194 = scmp.ne.s32.totalorder %s183, %s184
      %p195 = scmp.eq.s32.totalorder %s23, 0
      %p196 = por %p194, %p195
      %p197 = scmp.ne.s32.totalorder %s183, %s184
      %p198 = scmp.eq.s32.totalorder %s24, 1
      %p199 = por %p197, %p198
      %p201 = scmp.ne.s32.totalorder %s184, %s200
      %p202 = scmp.eq.s32.totalorder %s24, 0
      %p203 = por %p201, %p202
      %p204 = scmp.le.s32.totalorder 1, %s18
      %p205 = scmp.lt.s32.totalorder %s18, 3
      %p206 = pnand %p204, %p205
      %p207 = pneg %p206
      // Predicated region
      $region9: #{block_forward.2} parent=5 // pred_check
        _
      $region10: #{block_forward.2} parent=5 // pred_check_branch
        %209 = sbr.rel (%p206) target = $region12
      $region11: #{block_forward.2} parent=5 // pred_region
        %s210 = ssub.s32 %s18, 1
        // Predicated region
        $region13: #{block_forward.2} parent=11 // pred_check
          %p211 = pneg %p65
        $region14: #{block_forward.2} parent=11 // pred_check_branch
          %213 = sbr.rel (%p211) target = $region16
        $region15: #{block_forward.2} parent=11 // pred_region
          _
        $region16: #{block_forward.2} parent=11 // pred_fallthru
          _
        // Predicated region
        $region17: #{block_forward.2} parent=11 // pred_check
          %p214 = pneg %p86
        $region18: #{block_forward.2} parent=11 // pred_check_branch
          %216 = sbr.rel (%p214) target = $region20
        $region19: #{block_forward.2} parent=11 // pred_region
          _
        $region20: #{block_forward.2} parent=11 // pred_fallthru
          _
        // Predicated region
        $region21: #{block_forward.2} parent=11 // pred_check
          %p217 = pneg %p107
        $region22: #{block_forward.2} parent=11 // pred_check_branch
          %219 = sbr.rel (%p217) target = $region24
        $region23: #{block_forward.2} parent=11 // pred_region
          %221 = vsyncadd [#allocation6], 0
          %s222 = sshll.u32 %s3, 4
          %s223 = int_to_ptr.hbm [resolvable:$true] %s222
          %s224 = sshll.u32 [#allocation5], 4
          %s225 = int_to_ptr.vmem [resolvable:$true] %s224
          %230 = dma.hbm_to_vmem [thread:$0]  %s223, 256, %s225, [#allocation6], 64, 64, 4
        $region24: #{block_forward.2} parent=11 // pred_fallthru
          _
        // Predicated region
        $region25: #{block_forward.2} parent=11 // pred_check
          %p231 = pneg %p128
        $region26: #{block_forward.2} parent=11 // pred_check_branch
          %233 = sbr.rel (%p231) target = $region28
        $region27: #{block_forward.2} parent=11 // pred_region
          %235 = vsyncadd [#allocation6], 0
          %s237 = sshll.u32 %s4, 4
          %s238 = int_to_ptr.hbm [resolvable:$true] %s237
          %s239 = sshll.u32 [#allocation7], 4
          %s240 = int_to_ptr.vmem [resolvable:$true] %s239
          %242 = dma.hbm_to_vmem [thread:$0]  %s238, 16, %s240, [#allocation6]
        $region28: #{block_forward.2} parent=11 // pred_fallthru
          _
        // Predicated region
        $region29: #{block_forward.2} parent=11 // pred_check
          %p243 = pneg %p149
        $region30: #{block_forward.2} parent=11 // pred_check_branch
          %245 = sbr.rel (%p243) target = $region32
        $region31: #{block_forward.2} parent=11 // pred_region
          %247 = vsyncadd [#allocation9], 0
          %s248 = sshll.u32 %s5, 4
          %s249 = int_to_ptr.hbm [resolvable:$true] %s248
          %s250 = sshll.u32 [#allocation8], 4
          %s251 = int_to_ptr.vmem [resolvable:$true] %s250
          %256 = dma.hbm_to_vmem [thread:$0]  %s249, 256, %s251, [#allocation9], 64, 64, 4
        $region32: #{block_forward.2} parent=11 // pred_fallthru
          _
        // Predicated region
        $region33: #{block_forward.2} parent=11 // pred_check
          %p257 = pneg %p170
        $region34: #{block_forward.2} parent=11 // pred_check_branch
          %259 = sbr.rel (%p257) target = $region36
        $region35: #{block_forward.2} parent=11 // pred_region
          %261 = vsyncadd [#allocation9], 0
          %s263 = sshll.u32 %s6, 4
          %s264 = int_to_ptr.hbm [resolvable:$true] %s263
          %s265 = sshll.u32 [#allocation10], 4
          %s266 = int_to_ptr.vmem [resolvable:$true] %s265
          %268 = dma.hbm_to_vmem [thread:$0]  %s264, 16, %s266, [#allocation9]
        $region36: #{block_forward.2} parent=11 // pred_fallthru
          _
      $region12: #{block_forward.2} parent=5 // pred_fallthru
        _
      %p269 = scmp.lt.s32.totalorder %s18, 2
      // Predicated region
      $region37: #{block_forward.2} parent=5 // pred_check
        %p270 = pneg %p269
      $region38: #{block_forward.2} parent=5 // pred_check_branch
        %272 = sbr.rel (%p270) target = $region40
      $region39: #{block_forward.2} parent=5 // pred_region
        // Predicated region
        $region41: #{block_forward.2} parent=39 // pred_check
          %p273 = pneg %p38
        $region42: #{block_forward.2} parent=39 // pred_check_branch
          %275 = sbr.rel (%p273) target = $region44
        $region43: #{block_forward.2} parent=39 // pred_region
          %s276 = sand.u32 %s28, 1
          %s277 = scalar_lea.sflag [#allocation4], %s276
          %s278 = sand.u32 %s28, 1
          %s279 = smul.addr %s278, 8
          %s280 = scalar_lea.vmem [#allocation3], %s279
          %282 = vsyncadd %s277, 0
          %s283 = smul.addr %s18, 8
          %s284 = scalar_lea.hbm %s0, %s283
          %s286 = sshll.u32 %s284, 4
          %s287 = int_to_ptr.hbm [resolvable:$true] %s286
          %s288 = sshll.u32 %s280, 4
          %s289 = int_to_ptr.vmem [resolvable:$true] %s288
          %291 = dma.hbm_to_vmem [thread:$0]  %s287, 128, %s289, %s277
        $region44: #{block_forward.2} parent=39 // pred_fallthru
          _
      $region40: #{block_forward.2} parent=5 // pred_fallthru
        _
      %p292 = scmp.le.s32.totalorder 1, %s18
      %p293 = scmp.lt.s32.totalorder %s18, 3
      %p294 = pnand %p292, %p293
      %p295 = pneg %p294
      // Predicated region
      $region45: #{block_forward.2} parent=5 // pred_check
        _
      $region46: #{block_forward.2} parent=5 // pred_check_branch
        %297 = sbr.rel (%p294) target = $region48
      $region47: #{block_forward.2} parent=5 // pred_region
        %s298 = ssub.s32 %s18, 1
        %s299 = sand.u32 %s31, 1
        %s300 = scalar_lea.sflag [#allocation4], %s299
        %s301 = sand.u32 %s31, 1
        %s302 = smul.addr %s301, 8
        %s303 = scalar_lea.vmem [#allocation3], %s302
        // Predicated region
        $region49: #{block_forward.2} parent=47 // pred_check
          %p304 = pneg %p44
        $region50: #{block_forward.2} parent=47 // pred_check_branch
          %306 = sbr.rel (%p304) target = $region52
        $region51: #{block_forward.2} parent=47 // pred_region
          %308 = dma.done %s300, 128
        $region52: #{block_forward.2} parent=47 // pred_fallthru
          _
        // Predicated region
        $region53: #{block_forward.2} parent=47 // pred_check
          %p309 = pneg %p107
        $region54: #{block_forward.2} parent=47 // pred_check_branch
          %311 = sbr.rel (%p309) target = $region56
        $region55: #{block_forward.2} parent=47 // pred_region
          %313 = dma.done [#allocation6], 256
        $region56: #{block_forward.2} parent=47 // pred_fallthru
          _
        // Predicated region
        $region57: #{block_forward.2} parent=47 // pred_check
          %p314 = pneg %p128
        $region58: #{block_forward.2} parent=47 // pred_check_branch
          %316 = sbr.rel (%p314) target = $region60
        $region59: #{block_forward.2} parent=47 // pred_region
          %318 = dma.done [#allocation6], 16
        $region60: #{block_forward.2} parent=47 // pred_fallthru
          _
        // Predicated region
        $region61: #{block_forward.2} parent=47 // pred_check
          %p319 = pneg %p149
        $region62: #{block_forward.2} parent=47 // pred_check_branch
          %321 = sbr.rel (%p319) target = $region64
        $region63: #{block_forward.2} parent=47 // pred_region
          %323 = dma.done [#allocation9], 256
        $region64: #{block_forward.2} parent=47 // pred_fallthru
          _
        // Predicated region
        $region65: #{block_forward.2} parent=47 // pred_check
          %p324 = pneg %p170
        $region66: #{block_forward.2} parent=47 // pred_check_branch
          %326 = sbr.rel (%p324) target = $region68
        $region67: #{block_forward.2} parent=47 // pred_region
          %328 = dma.done [#allocation9], 16
        $region68: #{block_forward.2} parent=47 // pred_fallthru
          _
        %s329 = sand.u32 %s31, 1
        %s330 = scalar_lea.sflag [#allocation4], %s329
        %s331 = sand.u32 %s31, 1
        %s332 = smul.addr %s331, 8
        %s333 = scalar_lea.vmem [#allocation3], %s332
        %p334 = pneg %p44
        %p335 = pneg %p41
        %p336 = pneg %p65
        %p337 = pneg %p62
        %p338 = pneg %p86
        %p339 = pneg %p83
        %p340 = pneg %p107
        %p341 = pneg %p104
        %p342 = pneg %p128
        %p343 = pneg %p125
        %p344 = pneg %p149
        %p345 = pneg %p146
        %p346 = pneg %p170
        %p347 = pneg %p167
        %p348 = pneg %p196
        %p349 = pneg %p193
        %p350 = scmp.lt.s32.totalorder %s23, 1
        %s351 = scalar_select %p350, %s23, 1
        %s352 = smul.addr %s351, 4
        %s353 = scalar_lea.vmem %s7, %s352
        %p354 = scmp.lt.s32.totalorder %s23, 1
        %s355 = scalar_select %p354, %s23, 1
        %s356 = smul.addr %s355, 4
        %s357 = scalar_lea.vmem %s7, %s356
        %v359 = vld [vmem:[%s303] sm:$0xff]
        %vm360 = vcmask 261120
        %v361 = vsel %vm360, %v359, 0.0
        %362 = vadd.xlane.f32.xlu0 %v361
        %v363 = vpop.xlane.xlu0 %362
        %v364 = vrcp.pop 32.0
        %v365 = vmul.f32 32.0, %v364
        %v366 = vsub.f32 1.0, %v365
        %v367 = vmul.f32 %v364, %v366
        %v368 = vadd.f32 %v364, %v367
        %vm369 = vweird.f32 %v364
        %v370 = vsel %vm369, %v364, %v368
        %v371 = vmul.f32 %v363, %v370
        %v372 = vsub.f32 %v359, %v371
        %v373 = vmul.f32 %v372, %v372
        %v374 = vsel %vm360, %v373, 0.0
        %375 = vadd.xlane.f32.xlu0 %v374
        %v376 = vpop.xlane.xlu0 %375
        %v377 = vmul.f32 %v376, %v370
        %v378 = vadd.f32 %v377, 1e-05
        %v379 = vrsqrt.pop %v378
        %v380 = vmul.f32 %v379, %v378
        %v381 = vmul.f32 %v380, %v379
        %v382 = vmul.f32 0.5, %v381
        %v383 = vsub.f32 1.5, %v382
        %v384 = vmul.f32 %v379, %v383
        %vm385 = vweird.f32 %v378
        %vm386 = vweird.f32 %v379
        %vm387 = vmor %vm385, %vm386
        %v388 = vsel %vm387, %v379, %v384
        %v389 = vmul.f32 %v372, %v388
        %v390 = vld [vmem:[%s1] sm:$0x1]
        %v392 = vperm.slane %v390, 0
        %v394 = vmul.f32 %v389, %v392
        %v395 = vld [vmem:[%s2] sm:$0x1]
        %v397 = vperm.slane %v395, 0
        %v399 = vadd.f32 %v394, %v397
        %v400 = vpack.c.bf16 %v399, %v399
        %v401 = vld [vmem:[#allocation5] sm:$0xf]
        %v402 = vld [vmem:[#allocation5 + $0x4] sm:$0xf]
        %v403 = vld [vmem:[#allocation5 + $0x8] sm:$0xf]
        %v404 = vld [vmem:[#allocation5 + $0xc] sm:$0xf]
        %v405 = vld [vmem:[#allocation7] sm:$0x1]
        %v407 = vperm.slane %v405, 0
        %v413 = vunpack.c.l.b16 %v401
        %v414 = vunpack.c.l.b16 %v402
        %v415 = vunpack.c.l.b16 %v403
        %v416 = vunpack.c.l.b16 %v404
        %v417 = vpack.c.b16 %v414, %v413
        %v418 = vpack.c.b16 %v416, %v415
        %v422 = vsel %vm360, %v400, 0
        %424 = vmatpush.bf16.msra.mxu0 0
        %425 = vmatpush.bf16.msra.mxu0 0
        %426 = vmatpush.bf16.msra.mxu0 0
        %427 = vmatpush.bf16.msra.mxu0 0
        %428 = vmatpush.bf16.msra.mxu0 0
        %429 = vmatpush.bf16.msra.mxu0 0
        %430 = vmatpush.bf16.msra.mxu0 %v418
        %431 = vmatpush.bf16.msra.mxu0 %v417
        %432 = vmatmul.bf16.gmra.mxu0 %v422
        %v433 = vpop.f32.mrf.mxu0
        %v434 = vadd.f32 %v407, %v433
        %v435 = vpop.f32.mrf.mxu0
        %436 = vdwg.mxu0
        %v437 = vmul.f32 %v434, 0.35355338
        %v438 = vpack.c.bf16 %v437, %v437
        %v439 = vpack.c.bf16 %v434, %v434
        %441 = vrot.lane.b32.xlu0 %v439, 96
        %v442 = vpop.permute.xlu0 %441
        %vm443 = vcmask 64512
        %v445 = vsel %vm443, %v438, 0
        %v448 = vsel %vm443, %v442, 0
        %450 = vmatpush.bf16.xpose.msra.mxu0 0
        %451 = vmatpush.bf16.xpose.msra.mxu0 0
        %452 = vmatpush.bf16.xpose.msra.mxu0 0
        %453 = vmatpush.bf16.xpose.msra.mxu0 0
        %454 = vmatpush.bf16.xpose.msra.mxu0 0
        %455 = vmatpush.bf16.xpose.msra.mxu0 0
        %456 = vmatpush.bf16.xpose.msra.mxu0 0
        %457 = vmatpush.bf16.xpose.msra.mxu0 %v448
        %458 = vmatmul.bf16.gmra.mxu0 %v445
        %v459 = vpop.f32.mrf.mxu0
        %v460 = vadd.f32 0.0, %v459
        %v461 = vpop.f32.mrf.mxu0
        %462 = vdwg.mxu0
        %v463 = vsel %vm443, %v460, -inf
        %464 = vmax.xlane.f32.xlu0 %v463
        %v465 = vpop.xlane.xlu0 %464
        %v466 = vsub.f32 %v460, %v465
        %v467 = vmul.f32 %v466, 1.442695
        %v468 = vpow.pop %v467
        %v469 = vsel %vm443, %v468, 0.0
        %470 = vadd.xlane.f32.xlu0 %v469
        %v471 = vpop.xlane.xlu0 %470
        %v472 = vrcp.pop %v471
        %v473 = vmul.f32 %v468, %v472
        %v474 = vpack.c.bf16 %v473, %v473
        %475 = vrot.lane.b32.xlu0 %v439, 64
        %v476 = vpop.permute.xlu0 %475
        %v478 = vsel %vm443, %v474, 0
        %vm480 = vcmask 1043456
        %v482 = vsel %vm480, %v476, 0
        %484 = vmatpush.bf16.msra.mxu0 0
        %485 = vmatpush.bf16.msra.mxu0 0
        %486 = vmatpush.bf16.msra.mxu0 0
        %487 = vmatpush.bf16.msra.mxu0 0
        %488 = vmatpush.bf16.msra.mxu0 0
        %489 = vmatpush.bf16.msra.mxu0 0
        %490 = vmatpush.bf16.msra.mxu0 0
        %491 = vmatpush.bf16.msra.mxu0 %v482
        %492 = vmatmul.bf16.gmra.mxu0 %v478
        %v493 = vpop.f32.mrf.mxu0
        %v494 = vadd.f32 0.0, %v493
        %v495 = vpop.f32.mrf.mxu0
        %496 = vdwg.mxu0
        %497 = vst.msk [vmem:[#allocation2] sm:$0xff] %vm443, %v494
        %499 = vrot.lane.b32.xlu0 %v438, 120
        %v500 = vpop.permute.xlu0 %499
        %501 = vrot.lane.b32.xlu0 %v439, 88
        %v502 = vpop.permute.xlu0 %501
        %v504 = vsel %vm443, %v500, 0
        %v507 = vsel %vm443, %v502, 0
        %509 = vmatpush.bf16.xpose.msra.mxu0 0
        %510 = vmatpush.bf16.xpose.msra.mxu0 0
        %511 = vmatpush.bf16.xpose.msra.mxu0 0
        %512 = vmatpush.bf16.xpose.msra.mxu0 0
        %513 = vmatpush.bf16.xpose.msra.mxu0 0
        %514 = vmatpush.bf16.xpose.msra.mxu0 0
        %515 = vmatpush.bf16.xpose.msra.mxu0 0
        %516 = vmatpush.bf16.xpose.msra.mxu0 %v507
        %517 = vmatmul.bf16.gmra.mxu0 %v504
        %v518 = vpop.f32.mrf.mxu0
        %v519 = vadd.f32 0.0, %v518
        %v520 = vpop.f32.mrf.mxu0
        %521 = vdwg.mxu0
        %v522 = vsel %vm443, %v519, -inf
        %523 = vmax.xlane.f32.xlu0 %v522
        %v524 = vpop.xlane.xlu0 %523
        %v525 = vsub.f32 %v519, %v524
        %v526 = vmul.f32 %v525, 1.442695
        %v527 = vpow.pop %v526
        %v528 = vsel %vm443, %v527, 0.0
        %529 = vadd.xlane.f32.xlu0 %v528
        %v530 = vpop.xlane.xlu0 %529
        %v531 = vrcp.pop %v530
        %v532 = vmul.f32 %v527, %v531
        %v533 = vpack.c.bf16 %v532, %v532
        %534 = vrot.lane.b32.xlu0 %v439, 56
        %v535 = vpop.permute.xlu0 %534
        %v537 = vsel %vm443, %v533, 0
        %v540 = vsel %vm480, %v535, 0
        %542 = vmatpush.bf16.msra.mxu0 0
        %543 = vmatpush.bf16.msra.mxu0 0
        %544 = vmatpush.bf16.msra.mxu0 0
        %545 = vmatpush.bf16.msra.mxu0 0
        %546 = vmatpush.bf16.msra.mxu0 0
        %547 = vmatpush.bf16.msra.mxu0 0
        %548 = vmatpush.bf16.msra.mxu0 0
        %549 = vmatpush.bf16.msra.mxu0 %v540
        %550 = vmatmul.bf16.gmra.mxu0 %v537
        %v551 = vpop.f32.mrf.mxu0
        %v552 = vadd.f32 0.0, %v551
        %v553 = vpop.f32.mrf.mxu0
        %554 = vdwg.mxu0
        %556 = vrot.lane.b32.xlu0 %v552, 8
        %v557 = vpop.permute.xlu0 %556
        %vm559 = vcmask 130112
        %560 = vst.msk [vmem:[#allocation2] sm:$0xff] %vm559, %v557
        %561 = vrot.lane.b32.xlu0 %v438, 112
        %v562 = vpop.permute.xlu0 %561
        %563 = vrot.lane.b32.xlu0 %v439, 80
        %v564 = vpop.permute.xlu0 %563
        %v566 = vsel %vm443, %v562, 0
        %v569 = vsel %vm443, %v564, 0
        %571 = vmatpush.bf16.xpose.msra.mxu0 0
        %572 = vmatpush.bf16.xpose.msra.mxu0 0
        %573 = vmatpush.bf16.xpose.msra.mxu0 0
        %574 = vmatpush.bf16.xpose.msra.mxu0 0
        %575 = vmatpush.bf16.xpose.msra.mxu0 0
        %576 = vmatpush.bf16.xpose.msra.mxu0 0
        %577 = vmatpush.bf16.xpose.msra.mxu0 0
        %578 = vmatpush.bf16.xpose.msra.mxu0 %v569
        %579 = vmatmul.bf16.gmra.mxu0 %v566
        %v580 = vpop.f32.mrf.mxu0
        %v581 = vadd.f32 0.0, %v580
        %v582 = vpop.f32.mrf.mxu0
        %583 = vdwg.mxu0
        %v584 = vsel %vm443, %v581, -inf
        %585 = vmax.xlane.f32.xlu0 %v584
        %v586 = vpop.xlane.xlu0 %585
        %v587 = vsub.f32 %v581, %v586
        %v588 = vmul.f32 %v587, 1.442695
        %v589 = vpow.pop %v588
        %v590 = vsel %vm443, %v589, 0.0
        %591 = vadd.xlane.f32.xlu0 %v590
        %v592 = vpop.xlane.xlu0 %591
        %v593 = vrcp.pop %v592
        %v594 = vmul.f32 %v589, %v593
        %v595 = vpack.c.bf16 %v594, %v594
        %596 = vrot.lane.b32.xlu0 %v439, 48
        %v597 = vpop.permute.xlu0 %596
        %v599 = vsel %vm443, %v595, 0
        %v602 = vsel %vm480, %v597, 0
        %604 = vmatpush.bf16.msra.mxu0 0
        %605 = vmatpush.bf16.msra.mxu0 0
        %606 = vmatpush.bf16.msra.mxu0 0
        %607 = vmatpush.bf16.msra.mxu0 0
        %608 = vmatpush.bf16.msra.mxu0 0
        %609 = vmatpush.bf16.msra.mxu0 0
        %610 = vmatpush.bf16.msra.mxu0 0
        %611 = vmatpush.bf16.msra.mxu0 %v602
        %612 = vmatmul.bf16.gmra.mxu0 %v599
        %v613 = vpop.f32.mrf.mxu0
        %v614 = vadd.f32 0.0, %v613
        %v615 = vpop.f32.mrf.mxu0
        %616 = vdwg.mxu0
        %618 = vrot.lane.b32.xlu0 %v614, 16
        %v619 = vpop.permute.xlu0 %618
        %vm621 = vcmask 195712
        %622 = vst.msk [vmem:[#allocation2] sm:$0xff] %vm621, %v619
        %623 = vrot.lane.b32.xlu0 %v438, 104
        %v624 = vpop.permute.xlu0 %623
        %625 = vrot.lane.b32.xlu0 %v439, 72
        %v626 = vpop.permute.xlu0 %625
        %v628 = vsel %vm443, %v624, 0
        %v631 = vsel %vm443, %v626, 0
        %633 = vmatpush.bf16.xpose.msra.mxu0 0
        %634 = vmatpush.bf16.xpose.msra.mxu0 0
        %635 = vmatpush.bf16.xpose.msra.mxu0 0
        %636 = vmatpush.bf16.xpose.msra.mxu0 0
        %637 = vmatpush.bf16.xpose.msra.mxu0 0
        %638 = vmatpush.bf16.xpose.msra.mxu0 0
        %639 = vmatpush.bf16.xpose.msra.mxu0 0
        %640 = vmatpush.bf16.xpose.msra.mxu0 %v631
        %641 = vmatmul.bf16.gmra.mxu0 %v628
        %v642 = vpop.f32.mrf.mxu0
        %v643 = vadd.f32 0.0, %v642
        %v644 = vpop.f32.mrf.mxu0
        %645 = vdwg.mxu0
        %v646 = vsel %vm443, %v643, -inf
        %647 = vmax.xlane.f32.xlu0 %v646
        %v648 = vpop.xlane.xlu0 %647
        %v649 = vsub.f32 %v643, %v648
        %v650 = vmul.f32 %v649, 1.442695
        %v651 = vpow.pop %v650
        %v652 = vsel %vm443, %v651, 0.0
        %653 = vadd.xlane.f32.xlu0 %v652
        %v654 = vpop.xlane.xlu0 %653
        %v655 = vrcp.pop %v654
        %v656 = vmul.f32 %v651, %v655
        %v657 = vpack.c.bf16 %v656, %v656
        %658 = vrot.lane.b32.xlu0 %v439, 40
        %v659 = vpop.permute.xlu0 %658
        %v661 = vsel %vm443, %v657, 0
        %v664 = vsel %vm480, %v659, 0
        %666 = vmatpush.bf16.msra.mxu0 0
        %667 = vmatpush.bf16.msra.mxu0 0
        %668 = vmatpush.bf16.msra.mxu0 0
        %669 = vmatpush.bf16.msra.mxu0 0
        %670 = vmatpush.bf16.msra.mxu0 0
        %671 = vmatpush.bf16.msra.mxu0 0
        %672 = vmatpush.bf16.msra.mxu0 0
        %673 = vmatpush.bf16.msra.mxu0 %v664
        %674 = vmatmul.bf16.gmra.mxu0 %v661
        %v675 = vpop.f32.mrf.mxu0
        %v676 = vadd.f32 0.0, %v675
        %v677 = vpop.f32.mrf.mxu0
        %678 = vdwg.mxu0
        %680 = vrot.lane.b32.xlu0 %v676, 24
        %v681 = vpop.permute.xlu0 %680
        %vm683 = vcmask 261312
        %684 = vst.msk [vmem:[#allocation2] sm:$0xff] %vm683, %v681
        %v685 = vld [vmem:[#allocation2] sm:$0xff]
        %v686 = vpack.c.bf16 %v685, %v685
        %v687 = vld [vmem:[#allocation8] sm:$0xf]
        %v688 = vld [vmem:[#allocation8 + $0x4] sm:$0xf]
        %v689 = vld [vmem:[#allocation8 + $0x8] sm:$0xf]
        %v690 = vld [vmem:[#allocation8 + $0xc] sm:$0xf]
        %v691 = vld [vmem:[#allocation10] sm:$0x1]
        %v693 = vperm.slane %v691, 0
        %v699 = vunpack.c.l.b16 %v687
        %v700 = vunpack.c.l.b16 %v688
        %v701 = vunpack.c.l.b16 %v689
        %v702 = vunpack.c.l.b16 %v690
        %v703 = vpack.c.b16 %v700, %v699
        %v704 = vpack.c.b16 %v702, %v701
        %v708 = vsel %vm360, %v686, 0
        %710 = vmatpush.bf16.msra.mxu0 0
        %711 = vmatpush.bf16.msra.mxu0 0
        %712 = vmatpush.bf16.msra.mxu0 0
        %713 = vmatpush.bf16.msra.mxu0 0
        %714 = vmatpush.bf16.msra.mxu0 0
        %715 = vmatpush.bf16.msra.mxu0 0
        %716 = vmatpush.bf16.msra.mxu0 %v704
        %717 = vmatpush.bf16.msra.mxu0 %v703
        %718 = vmatmul.bf16.gmra.mxu0 %v708
        %v719 = vpop.f32.mrf.mxu0
        %v720 = vadd.f32 %v693, %v719
        %v721 = vpop.f32.mrf.mxu0
        %722 = vdwg.mxu0
        %v723 = vadd.f32 %v359, %v720
        %v724 = vpack.c.bf16 %v723, %v723
        %vm725 = vcmask 257024
        %726 = vst.msk [vmem:[%s357] sm:$0xf] %vm725, %v724
        %p727 = scmp.lt.s32.totalorder %s23, 1
        %s728 = scalar_select %p727, %s23, 1
        %s729 = smul.addr %s728, 4
        %s730 = scalar_lea.vmem %s7, %s729
        // Predicated region
        $region69: #{block_forward.2} parent=47 // pred_check
          %p731 = pneg %p193
        $region70: #{block_forward.2} parent=47 // pred_check_branch
          %733 = sbr.rel (%p731) target = $region72
        $region71: #{block_forward.2} parent=47 // pred_region
          _
        $region72: #{block_forward.2} parent=47 // pred_fallthru
          _
      $region48: #{block_forward.2} parent=5 // pred_fallthru
        _
      %p734 = scmp.le.s32.totalorder 2, %s18
      // Predicated region
      $region73: #{block_forward.2} parent=5 // pred_check
        %p735 = pneg %p734
      $region74: #{block_forward.2} parent=5 // pred_check_branch
        %737 = sbr.rel (%p735) target = $region76
      $region75: #{block_forward.2} parent=5 // pred_region
        %s738 = ssub.s32 %s18, 2
        // Predicated region
        $region77: #{block_forward.2} parent=75 // pred_check
          %p739 = pneg %p199
        $region78: #{block_forward.2} parent=75 // pred_check_branch
          %741 = sbr.rel (%p739) target = $region80
        $region79: #{block_forward.2} parent=75 // pred_region
          %p742 = scmp.lt.s32.totalorder %s24, 1
          %s743 = scalar_select %p742, %s24, 1
          %s744 = smul.addr %s743, 4
          %s745 = scalar_lea.vmem %s7, %s744
        $region80: #{block_forward.2} parent=75 // pred_fallthru
          _
      $region76: #{block_forward.2} parent=5 // pred_fallthru
        _
    $region6: #{block_forward.2} parent=1 // loop_footer
      %s22 = sadd.s32 1, %s18
    $region7: #{block_forward.2} parent=1 // loop_footer_branch
      %17 = sbr.rel target = $region3
    $region8: #{block_forward.2} parent=1 // loop_exit
      _
    %746 = vsyncpa [#allocation4], 1
    %s747 = scalar_lea.sflag [#allocation4], 1
    %748 = vsyncpa %s747, 1
    %749 = vsyncpa [#allocation6], 1
    %750 = vsyncpa [#allocation9], 1

</llo_original>
